<compile_context>
chip_gen: v6e
topology: v6e:2x2x1
jax: 0.10.0
libtpu: 0.0.40
codegen_flags: <defaults>
</compile_context>

<pallas_src>
import functools

import jax
import jax.numpy as jnp
from jax.experimental import pallas as pl
from jax.experimental.pallas import tpu as pltpu


def _round_up(x: int, m: int) -> int:
    return (x + m - 1) // m * m


# ----------------------------- Pallas kernel --------------------------------
def _bias_adj_footprints_kernel(
    adjf_ref,    # SMEM (B_padded,) f32    scalar-prefetched footprint adjustments
    x_ref,       # (B_tile, C_pad, L_in)   zero-padded X ('same' halo + lane pad)
    wf_ref,      # (K, S_pad, C_pad)       conv taps, wf[k,s,c] == torch W[s,c,k]
    cb_ref,      # (S_pad, 1) f32          conv bias
    lw_ref,      # (C_pad, 1) f32          count-head linear weight (column)
    bind_ref,    # out (B_tile, S_pad, L_out) f32
    count_ref,   # out (1, B_tile, 1) f32  un-biased, un-adjusted count head
    *, K, L_out, inv_L, B_tile,
):
    f32 = jnp.float32
    base = pl.program_id(0) * B_tile
    cb = cb_ref[...]                                    # (S_pad, 1), loop-invariant
    w_taps = [wf_ref[k] for k in range(K)]              # loop-invariant over b

    # --- conv1d('same') + per-batch footprint adjustment ---------------------
    def _per_batch(b, carry):
        xb = x_ref[b]                                   # (C_pad, L_in)
        acc = None
        for k in range(K):                              # static tap unroll (K small)
            part = jnp.dot(w_taps[k], xb, preferred_element_type=f32)  # (S_pad, L_in)
            shifted = part[:, k:k + L_out]              # output-side shift (S_pad rows)
            acc = shifted if acc is None else acc + shifted
        adj_b = adjf_ref[base + b]                      # SMEM scalar read
        bind_ref[b] = ((acc + cb) * adj_b).astype(bind_ref.dtype)
        return carry

    jax.lax.fori_loop(0, B_tile, _per_batch, 0, unroll=True)

    # --- count head: Linear(mean over seq), batched over the block -----------
    # halo / lane / channel / batch pad entries are all zero, so a full-row sum
    # times 1/L equals the mean over the valid L columns.
    xsums = jnp.sum(x_ref[...], axis=-1, dtype=f32)     # (B_tile, C_pad)
    cnt = jnp.dot(xsums, lw_ref[...], preferred_element_type=f32) * inv_L  # (B_tile,1)
    count_ref[0] = cnt.astype(count_ref.dtype)


# ------------------------------ JAX wrapper ---------------------------------
def bias_adjusted_footprints_head(x, coverages, params, *, block_b=4,
                                  input_dtype=jnp.float32, crop_outputs=True):
    """x: (B, C, L); coverages: (B, D_bias) or None (identity adjustment).

    block_b guidance: 1-2 on v7x (64 MiB VMEM), 4-8 on v6e/v5e; bf16
    input_dtype halves x HBM traffic (accumulation stays f32).
    """
    B, C, L = x.shape
    K, S, Cw = params["conv_w"].shape
    assert Cw == C
    assert K % 2 == 1, "'same' padding matches PyTorch Conv1d only for odd K"
    pad = K // 2
    isz = jnp.dtype(input_dtype).itemsize

    # lane/sublane-dense padded sizes
    L_out = _round_up(L, 128)                 # lane-dense output width
    L_in = L_out + 2 * pad                    # conv input width incl. 'same' halo
    S_pad = _round_up(S, 8)
    C_pad = _round_up(C, 16 if isz < 4 else 8)
    # cap B_tile at ceil(B/2): >=2 grid steps so both v7x TCs get work.
    B_tile = max(1, min(block_b, -(-B // 2)))
    G = -(-B // B_tile)
    B_padded = G * B_tile

    # --- hoisted adjustment heads (tiny O(B*D*H) flops, plain JAX) -----------
    if coverages is not None:
        assert coverages.shape[0] == B
        cov = coverages.astype(jnp.float32)
        h = jax.nn.gelu(cov @ params["w1"] + params["b1"], approximate=False)
        adj_foot = (h @ params["w2"] + params["b2"])[:, 0]        # (B,)
        adj_count = (cov @ params["wc"] + params["bc"])[:, 0]     # (B,)
    else:
        adj_foot = jnp.ones((B,), jnp.float32)
        adj_count = jnp.ones((B,), jnp.float32)
    adjf_flat = jnp.pad(adj_foot, (0, B_padded - B)).astype(jnp.float32)

    # --- single combined pad of x: batch round-up, channel->sublane multiple,
    #     left 'same' halo and right lane padding ------------------------------
    x_in = jnp.pad(
        x, ((0, B_padded - B), (0, C_pad - C), (pad, L_in - pad - L))
    ).astype(input_dtype)

    # --- conv taps (K, S_pad, C_pad) and small f32 weights --------------------
    wf = jnp.pad(params["conv_w"],
                 ((0, 0), (0, S_pad - S), (0, C_pad - C))).astype(input_dtype)
    cb = jnp.pad(params["conv_b"], ((0, S_pad - S), (0, 0))).astype(jnp.float32)
    lw_col = jnp.pad(params["lin_w"].T, ((0, C_pad - C), (0, 0))).astype(jnp.float32)

    kernel = functools.partial(
        _bias_adj_footprints_kernel, K=K, L_out=L_out, inv_L=1.0 / L, B_tile=B_tile)

    # explicit VMEM budget: double-buffered x/bind blocks + weights + f32 temps
    x_blk = B_tile * C_pad * L_in * isz
    bind_blk = B_tile * S_pad * L_out * 4
    w_blk = K * S_pad * C_pad * isz + (S_pad + C_pad) * 4
    tmp = 2 * S_pad * L_in * 4 + B_tile * C_pad * 4
    vmem_limit = int(min(64 << 20,
                         max(32 << 20, 2 * (x_blk + bind_blk + w_blk) + tmp + (1 << 20))))

    out_shape = (
        jax.ShapeDtypeStruct((B_padded, S_pad, L_out), jnp.float32),
        jax.ShapeDtypeStruct((G, B_tile, 1), jnp.float32),
    )

    def _build(weight_mode):
        def _wspec(shape):
            zeros = (0,) * len(shape)
            kwargs = {} if weight_mode is None else {"pipeline_mode": weight_mode}
            return pl.BlockSpec(shape, lambda g, adjf: zeros, **kwargs)

        grid_spec = pltpu.PrefetchScalarGridSpec(
            num_scalar_prefetch=1,            # adj_foot -> SMEM, scalar reads in-kernel
            grid=(G,),
            in_specs=[
                pl.BlockSpec((B_tile, C_pad, L_in), lambda g, adjf: (g, 0, 0)),
                _wspec((K, S_pad, C_pad)),    # conv taps (grid-invariant)
                _wspec((S_pad, 1)),           # conv bias
                _wspec((C_pad, 1)),           # count linear weight
            ],
            out_specs=(
                pl.BlockSpec((B_tile, S_pad, L_out), lambda g, adjf: (g, 0, 0)),
                pl.BlockSpec((1, B_tile, 1), lambda g, adjf: (g, 0, 0)),
            ),
        )
        return pl.pallas_call(
            kernel, out_shape=out_shape, grid_spec=grid_spec,
            compiler_params=pltpu.CompilerParams(
                dimension_semantics=("parallel",),
                vmem_limit_bytes=vmem_limit),
        )

    args = (adjf_flat, x_in, wf, cb, lw_col)
    try:
        # single-buffer the grid-invariant weight blocks (free VMEM headroom)
        bind_p, count_raw = _build(pl.Buffered(1))(*args)
    except Exception:  # graceful fallback: jax build without pipeline_mode support
        bind_p, count_raw = _build(None)(*args)

    count = (count_raw.reshape(B_padded)[:B] + params["lin_b"][0, 0]) * adj_count
    if crop_outputs and (B_padded, S_pad, L_out) != (B, S, L):
        bind_p = bind_p[:B, :S, :L]
    return bind_p, count


# --------------------------- pure-JAX reference ------------------------------
def _reference(x, coverages, p):
    B, C, L = x.shape
    K, S, _ = p["conv_w"].shape
    pad = K // 2
    h = jax.nn.gelu(coverages @ p["w1"] + p["b1"], approximate=False)
    adj_foot = (h @ p["w2"] + p["b2"])[:, None]                      # (B, 1, 1)
    adj_count = (coverages @ p["wc"] + p["bc"])[:, 0]                # (B,)
    xpad = jnp.pad(x, ((0, 0), (0, 0), (pad, pad)))
    bind = jnp.zeros((B, S, L), jnp.float32)
    for k in range(K):
        bind = bind + jnp.einsum("sc,bcl->bsl", p["conv_w"][k], xpad[:, :, k:k + L])
    bind = bind + p["conv_b"][:, 0][None, :, None]
    count = (x.mean(-1) @ p["lin_w"].T + p["lin_b"][0])[:, 0]        # (B,)
    return bind * adj_foot, count * adj_count


# --------------------------------- main --------------------------------------
if __name__ == "__main__":
    B, C, L = 2, 4, 16          # batch, n_filters, seq_len
    S, K = 8, 5                 # n_scales, conv kernel size
    D_bias = 1
    H = min(int(D_bias * 16), 32)   # adjustment MLP hidden dim (=16)

    key = jax.random.PRNGKey(0)
    ks = jax.random.split(key, 12)

    # Deterministic synthetic parameters (mirror the __init__ initialization).
    params = {
        "w1": 0.01 * jax.random.normal(ks[0], (D_bias, H), jnp.float32),
        "b1": 0.01 * jax.random.normal(ks[1], (1, H), jnp.float32),
        "w2": 0.01 * jax.random.normal(ks[2], (H, 1), jnp.float32),
        "b2": 1.0 + 0.01 * jax.random.normal(ks[3], (1, 1), jnp.float32),
        "wc": 0.01 * jax.random.normal(ks[4], (D_bias, 1), jnp.float32),
        "bc": 1.0 + 0.01 * jax.random.normal(ks[5], (1, 1), jnp.float32),
        "conv_w": 0.05 * jax.random.normal(ks[6], (K, S, C), jnp.float32),
        "conv_b": 0.05 * jax.random.normal(ks[7], (S, 1), jnp.float32),
        "lin_w": 0.05 * jax.random.normal(ks[8], (1, C), jnp.float32),
        "lin_b": 0.05 * jax.random.normal(ks[9], (1, 1), jnp.float32),
    }

    x = jax.random.normal(ks[10], (B, C, L), jnp.float32)
    coverages = jax.random.normal(ks[11], (B, D_bias), jnp.float32)

    bind_ref, count_ref = _reference(x, coverages, params)

    # f32 path (exact check)
    bind, count = bias_adjusted_footprints_head(x, coverages, params)
    bind = jax.block_until_ready(bind)
    count = jax.block_until_ready(count)
    assert bind.shape == (B, S, L) and count.shape == (B,)
    assert jnp.allclose(bind, bind_ref, atol=1e-4, rtol=1e-4)
    assert jnp.allclose(count, count_ref, atol=1e-4, rtol=1e-4)

    # bf16 MXU-operand path (f32 accumulation / epilogue), looser tolerance
    bind16, count16 = bias_adjusted_footprints_head(
        x, coverages, params, input_dtype=jnp.bfloat16)
    bind16 = jax.block_until_ready(bind16)
    count16 = jax.block_until_ready(count16)
    assert jnp.allclose(bind16, bind_ref, atol=3e-2, rtol=3e-2)
    assert jnp.allclose(count16, count_ref, atol=3e-2, rtol=3e-2)

    print("KERNEL_OK")
</pallas_src>

<mosaic_0001>
module attributes {stable_mosaic.version = 11 : i64} {
  func.func @_bias_adj_footprints_kernel(%arg0: i32, %arg1: memref<2xf32, #tpu.memory_space<smem>>, %arg2: memref<1x8x132xf32, #tpu.memory_space<vmem>>, %arg3: memref<5x8x8xf32, #tpu.memory_space<vmem>>, %arg4: memref<8x1xf32, #tpu.memory_space<vmem>>, %arg5: memref<8x1xf32, #tpu.memory_space<vmem>>, %arg6: memref<1x8x128xf32, #tpu.memory_space<vmem>>, %arg7: memref<1x1x1xf32, #tpu.memory_space<vmem>>) attributes {dimension_semantics = [#tpu.dimension_semantics<parallel>], iteration_bounds = array<i64: 2>, scalar_prefetch = 1 : i64, scratch_operands = 0 : i64, tpu.core_type = #tpu.core_type<tc>, window_params = [{transform_indices = @transform_0, window_bounds = array<i64: 1, 8, 132>}, {pipeline_mode = #tpu.pipeline_mode<synchronous>, transform_indices = @transform_1, window_bounds = array<i64: 5, 8, 8>}, {pipeline_mode = #tpu.pipeline_mode<synchronous>, transform_indices = @transform_2, window_bounds = array<i64: 8, 1>}, {pipeline_mode = #tpu.pipeline_mode<synchronous>, transform_indices = @transform_3, window_bounds = array<i64: 8, 1>}, {transform_indices = @transform_4, window_bounds = array<i64: 1, 8, 128>}, {transform_indices = @transform_5, window_bounds = array<i64: 1, 1, 1>}]} {
    %c1_i32 = arith.constant 1 : i32
    %0 = arith.muli %arg0, %c1_i32 : i32
    %c0 = arith.constant 0 : index
    %c0_0 = arith.constant 0 : index
    %1 = vector.load %arg4[%c0, %c0_0] : memref<8x1xf32, #tpu.memory_space<vmem>>, vector<8x1xf32>
    %c0_1 = arith.constant 0 : index
    %c0_2 = arith.constant 0 : index
    %c0_3 = arith.constant 0 : index
    %2 = vector.load %arg3[%c0_1, %c0_2, %c0_3] : memref<5x8x8xf32, #tpu.memory_space<vmem>>, vector<1x8x8xf32>
    %3 = vector.shape_cast %2 : vector<1x8x8xf32> to vector<8x8xf32>
    %c1 = arith.constant 1 : index
    %c0_4 = arith.constant 0 : index
    %c0_5 = arith.constant 0 : index
    %4 = vector.load %arg3[%c1, %c0_4, %c0_5] : memref<5x8x8xf32, #tpu.memory_space<vmem>>, vector<1x8x8xf32>
    %5 = vector.shape_cast %4 : vector<1x8x8xf32> to vector<8x8xf32>
    %c2 = arith.constant 2 : index
    %c0_6 = arith.constant 0 : index
    %c0_7 = arith.constant 0 : index
    %6 = vector.load %arg3[%c2, %c0_6, %c0_7] : memref<5x8x8xf32, #tpu.memory_space<vmem>>, vector<1x8x8xf32>
    %7 = vector.shape_cast %6 : vector<1x8x8xf32> to vector<8x8xf32>
    %c3 = arith.constant 3 : index
    %c0_8 = arith.constant 0 : index
    %c0_9 = arith.constant 0 : index
    %8 = vector.load %arg3[%c3, %c0_8, %c0_9] : memref<5x8x8xf32, #tpu.memory_space<vmem>>, vector<1x8x8xf32>
    %9 = vector.shape_cast %8 : vector<1x8x8xf32> to vector<8x8xf32>
    %c4 = arith.constant 4 : index
    %c0_10 = arith.constant 0 : index
    %c0_11 = arith.constant 0 : index
    %10 = vector.load %arg3[%c4, %c0_10, %c0_11] : memref<5x8x8xf32, #tpu.memory_space<vmem>>, vector<1x8x8xf32>
    %11 = vector.shape_cast %10 : vector<1x8x8xf32> to vector<8x8xf32>
    %c0_i32 = arith.constant 0 : i32
    %12 = arith.index_cast %c0_i32 : i32 to index
    %c0_12 = arith.constant 0 : index
    %c0_13 = arith.constant 0 : index
    %13 = vector.load %arg2[%12, %c0_12, %c0_13] : memref<1x8x132xf32, #tpu.memory_space<vmem>>, vector<1x8x132xf32>
    %14 = vector.shape_cast %13 : vector<1x8x132xf32> to vector<8x132xf32>
    %cst = arith.constant dense<0.000000e+00> : vector<8x132xf32>
    %15 = tpu.matmul %3, %14, %cst {dimension_numbers = #tpu.dot_dimension_numbers<[1], [0], [0], [1], [0, 0, 1, 1], [], []>} : vector<8x8xf32>, vector<8x132xf32>, vector<8x132xf32> -> vector<8x132xf32>
    %16 = vector.extract_strided_slice %15 {offsets = [0, 0], sizes = [8, 128], strides = [1, 1]} : vector<8x132xf32> to vector<8x128xf32>
    %cst_14 = arith.constant dense<0.000000e+00> : vector<8x132xf32>
    %17 = tpu.matmul %5, %14, %cst_14 {dimension_numbers = #tpu.dot_dimension_numbers<[1], [0], [0], [1], [0, 0, 1, 1], [], []>} : vector<8x8xf32>, vector<8x132xf32>, vector<8x132xf32> -> vector<8x132xf32>
    %18 = vector.extract_strided_slice %17 {offsets = [0, 1], sizes = [8, 128], strides = [1, 1]} : vector<8x132xf32> to vector<8x128xf32>
    %19 = arith.addf %16, %18 : vector<8x128xf32>
    %cst_15 = arith.constant dense<0.000000e+00> : vector<8x132xf32>
    %20 = tpu.matmul %7, %14, %cst_15 {dimension_numbers = #tpu.dot_dimension_numbers<[1], [0], [0], [1], [0, 0, 1, 1], [], []>} : vector<8x8xf32>, vector<8x132xf32>, vector<8x132xf32> -> vector<8x132xf32>
    %21 = vector.extract_strided_slice %20 {offsets = [0, 2], sizes = [8, 128], strides = [1, 1]} : vector<8x132xf32> to vector<8x128xf32>
    %22 = arith.addf %19, %21 : vector<8x128xf32>
    %cst_16 = arith.constant dense<0.000000e+00> : vector<8x132xf32>
    %23 = tpu.matmul %9, %14, %cst_16 {dimension_numbers = #tpu.dot_dimension_numbers<[1], [0], [0], [1], [0, 0, 1, 1], [], []>} : vector<8x8xf32>, vector<8x132xf32>, vector<8x132xf32> -> vector<8x132xf32>
    %24 = vector.extract_strided_slice %23 {offsets = [0, 3], sizes = [8, 128], strides = [1, 1]} : vector<8x132xf32> to vector<8x128xf32>
    %25 = arith.addf %22, %24 : vector<8x128xf32>
    %cst_17 = arith.constant dense<0.000000e+00> : vector<8x132xf32>
    %26 = tpu.matmul %11, %14, %cst_17 {dimension_numbers = #tpu.dot_dimension_numbers<[1], [0], [0], [1], [0, 0, 1, 1], [], []>} : vector<8x8xf32>, vector<8x132xf32>, vector<8x132xf32> -> vector<8x132xf32>
    %27 = vector.extract_strided_slice %26 {offsets = [0, 4], sizes = [8, 128], strides = [1, 1]} : vector<8x132xf32> to vector<8x128xf32>
    %28 = arith.addf %25, %27 : vector<8x128xf32>
    %29 = arith.addi %0, %c0_i32 : i32
    %30 = arith.index_cast %29 : i32 to index
    %31 = memref.load %arg1[%30] : memref<2xf32, #tpu.memory_space<smem>>
    %32 = vector.broadcast %1 : vector<8x1xf32> to vector<8x128xf32>
    %33 = arith.addf %28, %32 : vector<8x128xf32>
    %34 = vector.broadcast %31 : f32 to vector<8x128xf32>
    %35 = arith.mulf %33, %34 : vector<8x128xf32>
    %36 = arith.index_cast %c0_i32 : i32 to index
    %c0_18 = arith.constant 0 : index
    %c0_19 = arith.constant 0 : index
    %37 = vector.load %arg6[%36, %c0_18, %c0_19] : memref<1x8x128xf32, #tpu.memory_space<vmem>>, vector<1x8x128xf32>
    %38 = vector.shape_cast %37 : vector<1x8x128xf32> to vector<8x128xf32>
    %39 = vector.shape_cast %35 : vector<8x128xf32> to vector<1x8x128xf32>
    tpu.vector_store %arg6[%36, %c0_18, %c0_19], %39 {strides = array<i32>} : memref<1x8x128xf32, #tpu.memory_space<vmem>>, vector<1x8x128xf32>,
    %c1_i32_20 = arith.constant 1 : i32
    %c0_21 = arith.constant 0 : index
    %c0_22 = arith.constant 0 : index
    %c0_23 = arith.constant 0 : index
    %40 = vector.load %arg2[%c0_21, %c0_22, %c0_23] : memref<1x8x132xf32, #tpu.memory_space<vmem>>, vector<1x8x132xf32>
    %cst_24 = arith.constant dense<0.000000e+00> : vector<1x8xf32>
    %41 = vector.multi_reduction <add>, %40, %cst_24 [2] : vector<1x8x132xf32> to vector<1x8xf32>
    %c0_25 = arith.constant 0 : index
    %c0_26 = arith.constant 0 : index
    %42 = vector.load %arg5[%c0_25, %c0_26] : memref<8x1xf32, #tpu.memory_space<vmem>>, vector<8x1xf32>
    %cst_27 = arith.constant dense<0.000000e+00> : vector<1x1xf32>
    %43 = tpu.matmul %41, %42, %cst_27 {dimension_numbers = #tpu.dot_dimension_numbers<[1], [0], [0], [1], [0, 0, 1, 1], [], []>} : vector<1x8xf32>, vector<8x1xf32>, vector<1x1xf32> -> vector<1x1xf32>
    %cst_28 = arith.constant 6.250000e-02 : f32
    %44 = vector.broadcast %cst_28 : f32 to vector<1x1xf32>
    %45 = arith.mulf %43, %44 : vector<1x1xf32>
    %c0_29 = arith.constant 0 : index
    %c0_30 = arith.constant 0 : index
    %c0_31 = arith.constant 0 : index
    %46 = vector.load %arg7[%c0_29, %c0_30, %c0_31] : memref<1x1x1xf32, #tpu.memory_space<vmem>>, vector<1x1x1xf32>
    %47 = vector.shape_cast %46 : vector<1x1x1xf32> to vector<1x1xf32>
    %48 = vector.shape_cast %45 : vector<1x1xf32> to vector<1x1x1xf32>
    tpu.vector_store %arg7[%c0_29, %c0_30, %c0_31], %48 {strides = array<i32>} : memref<1x1x1xf32, #tpu.memory_space<vmem>>, vector<1x1x1xf32>,
    return
  }
  func.func @transform_0(%arg0: i32, %arg1: memref<2xf32, #tpu.memory_space<smem>>) -> (i32, i32, i32) {
    %c0_i32 = arith.constant 0 : i32
    %c0_i32_0 = arith.constant 0 : i32
    %c0_i32_1 = arith.constant 0 : i32
    return %arg0, %c0_i32, %c0_i32_0 : i32, i32, i32
  }
  func.func @transform_1(%arg0: i32, %arg1: memref<2xf32, #tpu.memory_space<smem>>) -> (i32, i32, i32) {
    %c0_i32 = arith.constant 0 : i32
    %c0_i32_0 = arith.constant 0 : i32
    %c0_i32_1 = arith.constant 0 : i32
    %c0_i32_2 = arith.constant 0 : i32
    return %c0_i32, %c0_i32_0, %c0_i32_1 : i32, i32, i32
  }
  func.func @transform_2(%arg0: i32, %arg1: memref<2xf32, #tpu.memory_space<smem>>) -> (i32, i32) {
    %c0_i32 = arith.constant 0 : i32
    %c0_i32_0 = arith.constant 0 : i32
    %c0_i32_1 = arith.constant 0 : i32
    return %c0_i32, %c0_i32_0 : i32, i32
  }
  func.func @transform_3(%arg0: i32, %arg1: memref<2xf32, #tpu.memory_space<smem>>) -> (i32, i32) {
    %c0_i32 = arith.constant 0 : i32
    %c0_i32_0 = arith.constant 0 : i32
    %c0_i32_1 = arith.constant 0 : i32
    return %c0_i32, %c0_i32_0 : i32, i32
  }
  func.func @transform_4(%arg0: i32, %arg1: memref<2xf32, #tpu.memory_space<smem>>) -> (i32, i32, i32) {
    %c0_i32 = arith.constant 0 : i32
    %c0_i32_0 = arith.constant 0 : i32
    %c0_i32_1 = arith.constant 0 : i32
    return %arg0, %c0_i32, %c0_i32_0 : i32, i32, i32
  }
  func.func @transform_5(%arg0: i32, %arg1: memref<2xf32, #tpu.memory_space<smem>>) -> (i32, i32, i32) {
    %c0_i32 = arith.constant 0 : i32
    %c0_i32_0 = arith.constant 0 : i32
    %c0_i32_1 = arith.constant 0 : i32
    return %arg0, %c0_i32, %c0_i32_0 : i32, i32, i32
  }
}

module attributes {stable_mosaic.version = 11 : i64} {
  func.func @_bias_adj_footprints_kernel(%arg0: i32, %arg1: memref<2xf32, #tpu.memory_space<smem>>, %arg2: memref<1x8x132xf32, #tpu.memory_space<vmem>>, %arg3: memref<5x8x8xf32, #tpu.memory_space<vmem>>, %arg4: memref<8x1xf32, #tpu.memory_space<vmem>>, %arg5: memref<8x1xf32, #tpu.memory_space<vmem>>, %arg6: memref<1x8x128xf32, #tpu.memory_space<vmem>>, %arg7: memref<1x1x1xf32, #tpu.memory_space<vmem>>) attributes {dimension_semantics = [#tpu.dimension_semantics<parallel>], iteration_bounds = array<i64: 2>, scalar_prefetch = 1 : i64, scratch_operands = 0 : i64, tpu.core_type = #tpu.core_type<tc>, window_params = [{transform_indices = @transform_0, window_bounds = array<i64: 1, 8, 132>}, {pipeline_mode = #tpu.pipeline_mode<synchronous>, transform_indices = @transform_1, window_bounds = array<i64: 5, 8, 8>}, {pipeline_mode = #tpu.pipeline_mode<synchronous>, transform_indices = @transform_2, window_bounds = array<i64: 8, 1>}, {pipeline_mode = #tpu.pipeline_mode<synchronous>, transform_indices = @transform_3, window_bounds = array<i64: 8, 1>}, {transform_indices = @transform_4, window_bounds = array<i64: 1, 8, 128>}, {transform_indices = @transform_5, window_bounds = array<i64: 1, 1, 1>}]} {
    %c1_i32 = arith.constant 1 : i32
    %0 = arith.muli %arg0, %c1_i32 : i32
    %c0 = arith.constant 0 : index
    %c0_0 = arith.constant 0 : index
    %1 = vector.load %arg4[%c0, %c0_0] : memref<8x1xf32, #tpu.memory_space<vmem>>, vector<8x1xf32>
    %c0_1 = arith.constant 0 : index
    %c0_2 = arith.constant 0 : index
    %c0_3 = arith.constant 0 : index
    %2 = vector.load %arg3[%c0_1, %c0_2, %c0_3] : memref<5x8x8xf32, #tpu.memory_space<vmem>>, vector<1x8x8xf32>
    %3 = vector.shape_cast %2 : vector<1x8x8xf32> to vector<8x8xf32>
    %c1 = arith.constant 1 : index
    %c0_4 = arith.constant 0 : index
    %c0_5 = arith.constant 0 : index
    %4 = vector.load %arg3[%c1, %c0_4, %c0_5] : memref<5x8x8xf32, #tpu.memory_space<vmem>>, vector<1x8x8xf32>
    %5 = vector.shape_cast %4 : vector<1x8x8xf32> to vector<8x8xf32>
    %c2 = arith.constant 2 : index
    %c0_6 = arith.constant 0 : index
    %c0_7 = arith.constant 0 : index
    %6 = vector.load %arg3[%c2, %c0_6, %c0_7] : memref<5x8x8xf32, #tpu.memory_space<vmem>>, vector<1x8x8xf32>
    %7 = vector.shape_cast %6 : vector<1x8x8xf32> to vector<8x8xf32>
    %c3 = arith.constant 3 : index
    %c0_8 = arith.constant 0 : index
    %c0_9 = arith.constant 0 : index
    %8 = vector.load %arg3[%c3, %c0_8, %c0_9] : memref<5x8x8xf32, #tpu.memory_space<vmem>>, vector<1x8x8xf32>
    %9 = vector.shape_cast %8 : vector<1x8x8xf32> to vector<8x8xf32>
    %c4 = arith.constant 4 : index
    %c0_10 = arith.constant 0 : index
    %c0_11 = arith.constant 0 : index
    %10 = vector.load %arg3[%c4, %c0_10, %c0_11] : memref<5x8x8xf32, #tpu.memory_space<vmem>>, vector<1x8x8xf32>
    %11 = vector.shape_cast %10 : vector<1x8x8xf32> to vector<8x8xf32>
    %c0_i32 = arith.constant 0 : i32
    %12 = arith.index_cast %c0_i32 : i32 to index
    %c0_12 = arith.constant 0 : index
    %c0_13 = arith.constant 0 : index
    %13 = vector.load %arg2[%12, %c0_12, %c0_13] : memref<1x8x132xf32, #tpu.memory_space<vmem>>, vector<1x8x132xf32>
    %14 = vector.shape_cast %13 : vector<1x8x132xf32> to vector<8x132xf32>
    %cst = arith.constant dense<0.000000e+00> : vector<8x132xf32>
    %15 = tpu.matmul %3, %14, %cst {dimension_numbers = #tpu.dot_dimension_numbers<[1], [0], [0], [1], [0, 0, 1, 1], [], []>} : vector<8x8xf32>, vector<8x132xf32>, vector<8x132xf32> -> vector<8x132xf32>
    %16 = vector.extract_strided_slice %15 {offsets = [0, 0], sizes = [8, 128], strides = [1, 1]} : vector<8x132xf32> to vector<8x128xf32>
    %cst_14 = arith.constant dense<0.000000e+00> : vector<8x132xf32>
    %17 = tpu.matmul %5, %14, %cst_14 {dimension_numbers = #tpu.dot_dimension_numbers<[1], [0], [0], [1], [0, 0, 1, 1], [], []>} : vector<8x8xf32>, vector<8x132xf32>, vector<8x132xf32> -> vector<8x132xf32>
    %18 = vector.extract_strided_slice %17 {offsets = [0, 1], sizes = [8, 128], strides = [1, 1]} : vector<8x132xf32> to vector<8x128xf32>
    %19 = arith.addf %16, %18 : vector<8x128xf32>
    %cst_15 = arith.constant dense<0.000000e+00> : vector<8x132xf32>
    %20 = tpu.matmul %7, %14, %cst_15 {dimension_numbers = #tpu.dot_dimension_numbers<[1], [0], [0], [1], [0, 0, 1, 1], [], []>} : vector<8x8xf32>, vector<8x132xf32>, vector<8x132xf32> -> vector<8x132xf32>
    %21 = vector.extract_strided_slice %20 {offsets = [0, 2], sizes = [8, 128], strides = [1, 1]} : vector<8x132xf32> to vector<8x128xf32>
    %22 = arith.addf %19, %21 : vector<8x128xf32>
    %cst_16 = arith.constant dense<0.000000e+00> : vector<8x132xf32>
    %23 = tpu.matmul %9, %14, %cst_16 {dimension_numbers = #tpu.dot_dimension_numbers<[1], [0], [0], [1], [0, 0, 1, 1], [], []>} : vector<8x8xf32>, vector<8x132xf32>, vector<8x132xf32> -> vector<8x132xf32>
    %24 = vector.extract_strided_slice %23 {offsets = [0, 3], sizes = [8, 128], strides = [1, 1]} : vector<8x132xf32> to vector<8x128xf32>
    %25 = arith.addf %22, %24 : vector<8x128xf32>
    %cst_17 = arith.constant dense<0.000000e+00> : vector<8x132xf32>
    %26 = tpu.matmul %11, %14, %cst_17 {dimension_numbers = #tpu.dot_dimension_numbers<[1], [0], [0], [1], [0, 0, 1, 1], [], []>} : vector<8x8xf32>, vector<8x132xf32>, vector<8x132xf32> -> vector<8x132xf32>
    %27 = vector.extract_strided_slice %26 {offsets = [0, 4], sizes = [8, 128], strides = [1, 1]} : vector<8x132xf32> to vector<8x128xf32>
    %28 = arith.addf %25, %27 : vector<8x128xf32>
    %29 = arith.addi %0, %c0_i32 : i32
    %30 = arith.index_cast %29 : i32 to index
    %31 = memref.load %arg1[%30] : memref<2xf32, #tpu.memory_space<smem>>
    %32 = vector.broadcast %1 : vector<8x1xf32> to vector<8x128xf32>
    %33 = arith.addf %28, %32 : vector<8x128xf32>
    %34 = vector.broadcast %31 : f32 to vector<8x128xf32>
    %35 = arith.mulf %33, %34 : vector<8x128xf32>
    %36 = arith.index_cast %c0_i32 : i32 to index
    %c0_18 = arith.constant 0 : index
    %c0_19 = arith.constant 0 : index
    %37 = vector.load %arg6[%36, %c0_18, %c0_19] : memref<1x8x128xf32, #tpu.memory_space<vmem>>, vector<1x8x128xf32>
    %38 = vector.shape_cast %37 : vector<1x8x128xf32> to vector<8x128xf32>
    %39 = vector.shape_cast %35 : vector<8x128xf32> to vector<1x8x128xf32>
    tpu.vector_store %arg6[%36, %c0_18, %c0_19], %39 {strides = array<i32>} : memref<1x8x128xf32, #tpu.memory_space<vmem>>, vector<1x8x128xf32>,
    %c1_i32_20 = arith.constant 1 : i32
    %c0_21 = arith.constant 0 : index
    %c0_22 = arith.constant 0 : index
    %c0_23 = arith.constant 0 : index
    %40 = vector.load %arg2[%c0_21, %c0_22, %c0_23] : memref<1x8x132xf32, #tpu.memory_space<vmem>>, vector<1x8x132xf32>
    %cst_24 = arith.constant dense<0.000000e+00> : vector<1x8xf32>
    %41 = vector.multi_reduction <add>, %40, %cst_24 [2] : vector<1x8x132xf32> to vector<1x8xf32>
    %c0_25 = arith.constant 0 : index
    %c0_26 = arith.constant 0 : index
    %42 = vector.load %arg5[%c0_25, %c0_26] : memref<8x1xf32, #tpu.memory_space<vmem>>, vector<8x1xf32>
    %cst_27 = arith.constant dense<0.000000e+00> : vector<1x1xf32>
    %43 = tpu.matmul %41, %42, %cst_27 {dimension_numbers = #tpu.dot_dimension_numbers<[1], [0], [0], [1], [0, 0, 1, 1], [], []>} : vector<1x8xf32>, vector<8x1xf32>, vector<1x1xf32> -> vector<1x1xf32>
    %cst_28 = arith.constant 6.250000e-02 : f32
    %44 = vector.broadcast %cst_28 : f32 to vector<1x1xf32>
    %45 = arith.mulf %43, %44 : vector<1x1xf32>
    %c0_29 = arith.constant 0 : index
    %c0_30 = arith.constant 0 : index
    %c0_31 = arith.constant 0 : index
    %46 = vector.load %arg7[%c0_29, %c0_30, %c0_31] : memref<1x1x1xf32, #tpu.memory_space<vmem>>, vector<1x1x1xf32>
    %47 = vector.shape_cast %46 : vector<1x1x1xf32> to vector<1x1xf32>
    %48 = vector.shape_cast %45 : vector<1x1xf32> to vector<1x1x1xf32>
    tpu.vector_store %arg7[%c0_29, %c0_30, %c0_31], %48 {strides = array<i32>} : memref<1x1x1xf32, #tpu.memory_space<vmem>>, vector<1x1x1xf32>,
    return
  }
  func.func @transform_0(%arg0: i32, %arg1: memref<2xf32, #tpu.memory_space<smem>>) -> (i32, i32, i32) {
    %c0_i32 = arith.constant 0 : i32
    %c0_i32_0 = arith.constant 0 : i32
    %c0_i32_1 = arith.constant 0 : i32
    return %arg0, %c0_i32, %c0_i32_0 : i32, i32, i32
  }
  func.func @transform_1(%arg0: i32, %arg1: memref<2xf32, #tpu.memory_space<smem>>) -> (i32, i32, i32) {
    %c0_i32 = arith.constant 0 : i32
    %c0_i32_0 = arith.constant 0 : i32
    %c0_i32_1 = arith.constant 0 : i32
    %c0_i32_2 = arith.constant 0 : i32
    return %c0_i32, %c0_i32_0, %c0_i32_1 : i32, i32, i32
  }
  func.func @transform_2(%arg0: i32, %arg1: memref<2xf32, #tpu.memory_space<smem>>) -> (i32, i32) {
    %c0_i32 = arith.constant 0 : i32
    %c0_i32_0 = arith.constant 0 : i32
    %c0_i32_1 = arith.constant 0 : i32
    return %c0_i32, %c0_i32_0 : i32, i32
  }
  func.func @transform_3(%arg0: i32, %arg1: memref<2xf32, #tpu.memory_space<smem>>) -> (i32, i32) {
    %c0_i32 = arith.constant 0 : i32
    %c0_i32_0 = arith.constant 0 : i32
    %c0_i32_1 = arith.constant 0 : i32
    return %c0_i32, %c0_i32_0 : i32, i32
  }
  func.func @transform_4(%arg0: i32, %arg1: memref<2xf32, #tpu.memory_space<smem>>) -> (i32, i32, i32) {
    %c0_i32 = arith.constant 0 : i32
    %c0_i32_0 = arith.constant 0 : i32
    %c0_i32_1 = arith.constant 0 : i32
    return %arg0, %c0_i32, %c0_i32_0 : i32, i32, i32
  }
  func.func @transform_5(%arg0: i32, %arg1: memref<2xf32, #tpu.memory_space<smem>>) -> (i32, i32, i32) {
    %c0_i32 = arith.constant 0 : i32
    %c0_i32_0 = arith.constant 0 : i32
    %c0_i32_1 = arith.constant 0 : i32
    return %arg0, %c0_i32, %c0_i32_0 : i32, i32, i32
  }
}

</mosaic_0001>

<llo_original>
// kernel: tpu_custom_call.1
$region0: #{tpu_custom_call.1}
  #allocation0 [shape = 'u32[]', space=smem, size = 0x4, offset = 0x4, fixed_abs, tag = 'smem constant byte address 0x4 - core index']
  #allocation1 [shape = 'u32[144,128]{1,0:T(1,128)}', space=vmem, size = 0x12000, scoped, tag = 'internal scratch']
  #allocation2 [shape = 's32[1]{0}', space=sflag, size = 0x4, scoped, tag = 'scoped memory for tpu_custom_call.1']
  #allocation3 [shape = 'u8[512]{0}', space=smem, size = 0x200, scoped, tag = 'prefetched SMEM operand 0']
  %s0 = inlined_call_operand.vmem [shape: f32[2], index: 0, kind: input, shape index: {}]
  %s1 = inlined_call_operand.hbm [shape: f32[2,8,132], index: 1, kind: input, shape index: {}]
  %s2 = inlined_call_operand.hbm [shape: f32[5,8,8], index: 2, kind: input, shape index: {}]
  %s3 = inlined_call_operand.vmem [shape: f32[8,1], index: 3, kind: input, shape index: {}]
  %s4 = inlined_call_operand.vmem [shape: f32[8,1], index: 4, kind: input, shape index: {}]
  %s5 = inlined_call_operand.hbm [shape: f32[2,8,128], index: 5, kind: output, shape index: {0}]
  %s6 = inlined_call_operand.vmem [shape: f32[2,1,1], index: 6, kind: output, shape index: {1}]
  %7 = xla_tuple %s5, %s6
  %s8 = sld [smem:[#allocation0]]
  $region65: #{tpu_custom_call.1} parent=0
    _
  %s10 = ssub.s32 1, %s8
  %s11 = scalar_select 0, %s10, %s8
  %s12 = sshll.u32 %s0, 4
  %s13 = int_to_ptr.vmem [resolvable:$true] %s12
  %15 = dma.vmem_to_smem %s13, 16, [#allocation3], [#allocation2]
  %16 = dma.done [#allocation2], 16
  %17 = sfence
  $region1: #{tpu_custom_call.1} parent=0
    #allocation4 [shape = 'u8[16384]{0}', space=vmem, size = 0x4000, scoped, tag = 'input window, operand 1']
    #allocation5 [shape = 's32[2]{0}', space=sflag, size = 0x8, scoped, tag = 'scoped memory for tpu_custom_call.1']
    #allocation6 [shape = 's32[2]{0}', space=sflag, size = 0x8, scoped, tag = 'scoped memory for tpu_custom_call.1']
    #allocation7 [shape = 'u8[20480]{0}', space=vmem, size = 0x5000, scoped, tag = 'input window, operand 2, single buffered']
    #allocation8 [shape = 's32[1]{0}', space=sflag, size = 0x4, scoped, tag = 'scoped memory for tpu_custom_call.1']
    #allocation9 [shape = 'u8[8192]{0}', space=vmem, size = 0x2000, scoped, tag = 'output window, operand 0']
    %18 = vsyncpa [#allocation5], 0
    %s19 = scalar_lea.sflag [#allocation5], 1
    %20 = vsyncpa %s19, 0
    %21 = vsyncpa [#allocation8], 0
    %22 = vsyncpa [#allocation6], 0
    %s23 = scalar_lea.sflag [#allocation6], 1
    %24 = vsyncpa %s23, 0
    loop: start=0, step=1, limit=4
    $region2: #{tpu_custom_call.1} parent=1 // loop_pre_header
      _
    $region3: #{tpu_custom_call.1} parent=1 // loop_header
      %s26 = sphi 0, %s30
      %p27 = scmp.ge.s32.totalorder %s26, 4
      %s36 = sphi 0, %s38
      %s39 = sphi 0, %s36
      %s40 = sphi 0, %s39
      %s56 = sphi 0, %s40
      %s60 = sphi 0, %s60
      %s62 = sphi 0, %s60
      %s63 = sphi 0, %s62
      %s77 = sphi 0, %s63
      %s81 = sphi 0, %s81
      %s83 = sphi 0, %s81
      %s84 = sphi 0, %s83
      %s98 = sphi 0, %s84
      %s102 = sphi 0, %s102
      %s104 = sphi 0, %s102
      %s105 = sphi 0, %s104
      %s119 = sphi 0, %s105
      %s125 = sphi 0, %s127
      %s128 = sphi 0, %s125
      %s129 = sphi 0, %s128
      %s145 = sphi 0, %s129
      %s151 = sphi 0, %s153
      %s154 = sphi 0, %s151
      %s155 = sphi 0, %s154
      %s171 = sphi 0, %s155
    $region4: #{tpu_custom_call.1} parent=1 // loop_header_branch
      %29 = sbr.rel (%p27) target = $region8
    $region5: #{tpu_custom_call.1} parent=1 // loop_body
      %s31 = ssub.s32 %s26, 1
      %s32 = ssub.s32 %s26, 2
      %s33 = sadd.s32 %s26, 1
      %s34 = ssub.s32 %s26, %s33
      %p35 = scmp.eq.s32.totalorder %s34, 0
      %s37 = sadd.s32 %s36, 1
      %s38 = scalar_select %p35, %s36, %s37
      %p41 = pneg %p35
      %p42 = scmp.eq.s32.totalorder %s26, 1
      %p43 = por %p41, %p42
      %p44 = scmp.ne.s32.totalorder %s36, %s39
      %p45 = scmp.eq.s32.totalorder %s26, 0
      %p46 = por %p44, %p45
      %p47 = scmp.ne.s32.totalorder %s36, %s39
      %p48 = scmp.eq.s32.totalorder %s31, 1
      %p49 = por %p47, %p48
      %p50 = scmp.ne.s32.totalorder %s39, %s40
      %p51 = scmp.eq.s32.totalorder %s31, 0
      %p52 = por %p50, %p51
      %p53 = scmp.ne.s32.totalorder %s39, %s40
      %p54 = scmp.eq.s32.totalorder %s32, 1
      %p55 = por %p53, %p54
      %p57 = scmp.ne.s32.totalorder %s40, %s56
      %p58 = scmp.eq.s32.totalorder %s32, 0
      %p59 = por %p57, %p58
      %s61 = sadd.s32 %s60, 1
      %p64 = scmp.eq.s32.totalorder %s26, 1
      %p65 = scmp.ne.s32.totalorder %s60, %s62
      %p66 = scmp.eq.s32.totalorder %s26, 0
      %p67 = por %p65, %p66
      %p68 = scmp.ne.s32.totalorder %s60, %s62
      %p69 = scmp.eq.s32.totalorder %s31, 1
      %p70 = por %p68, %p69
      %p71 = scmp.ne.s32.totalorder %s62, %s63
      %p72 = scmp.eq.s32.totalorder %s31, 0
      %p73 = por %p71, %p72
      %p74 = scmp.ne.s32.totalorder %s62, %s63
      %p75 = scmp.eq.s32.totalorder %s32, 1
      %p76 = por %p74, %p75
      %p78 = scmp.ne.s32.totalorder %s63, %s77
      %p79 = scmp.eq.s32.totalorder %s32, 0
      %p80 = por %p78, %p79
      %s82 = sadd.s32 %s81, 1
      %p85 = scmp.eq.s32.totalorder %s26, 1
      %p86 = scmp.ne.s32.totalorder %s81, %s83
      %p87 = scmp.eq.s32.totalorder %s26, 0
      %p88 = por %p86, %p87
      %p89 = scmp.ne.s32.totalorder %s81, %s83
      %p90 = scmp.eq.s32.totalorder %s31, 1
      %p91 = por %p89, %p90
      %p92 = scmp.ne.s32.totalorder %s83, %s84
      %p93 = scmp.eq.s32.totalorder %s31, 0
      %p94 = por %p92, %p93
      %p95 = scmp.ne.s32.totalorder %s83, %s84
      %p96 = scmp.eq.s32.totalorder %s32, 1
      %p97 = por %p95, %p96
      %p99 = scmp.ne.s32.totalorder %s84, %s98
      %p100 = scmp.eq.s32.totalorder %s32, 0
      %p101 = por %p99, %p100
      %s103 = sadd.s32 %s102, 1
      %p106 = scmp.eq.s32.totalorder %s26, 1
      %p107 = scmp.ne.s32.totalorder %s102, %s104
      %p108 = scmp.eq.s32.totalorder %s26, 0
      %p109 = por %p107, %p108
      %p110 = scmp.ne.s32.totalorder %s102, %s104
      %p111 = scmp.eq.s32.totalorder %s31, 1
      %p112 = por %p110, %p111
      %p113 = scmp.ne.s32.totalorder %s104, %s105
      %p114 = scmp.eq.s32.totalorder %s31, 0
      %p115 = por %p113, %p114
      %p116 = scmp.ne.s32.totalorder %s104, %s105
      %p117 = scmp.eq.s32.totalorder %s32, 1
      %p118 = por %p116, %p117
      %p120 = scmp.ne.s32.totalorder %s105, %s119
      %p121 = scmp.eq.s32.totalorder %s32, 0
      %p122 = por %p120, %p121
      %s123 = ssub.s32 %s26, %s33
      %p124 = scmp.eq.s32.totalorder %s123, 0
      %s126 = sadd.s32 %s125, 1
      %s127 = scalar_select %p124, %s125, %s126
      %p130 = pneg %p124
      %p131 = scmp.eq.s32.totalorder %s26, 1
      %p132 = por %p130, %p131
      %p133 = scmp.ne.s32.totalorder %s125, %s128
      %p134 = scmp.eq.s32.totalorder %s26, 0
      %p135 = por %p133, %p134
      %p136 = scmp.ne.s32.totalorder %s125, %s128
      %p137 = scmp.eq.s32.totalorder %s31, 1
      %p138 = por %p136, %p137
      %p139 = scmp.ne.s32.totalorder %s128, %s129
      %p140 = scmp.eq.s32.totalorder %s31, 0
      %p141 = por %p139, %p140
      %p142 = scmp.ne.s32.totalorder %s128, %s129
      %p143 = scmp.eq.s32.totalorder %s32, 1
      %p144 = por %p142, %p143
      %p146 = scmp.ne.s32.totalorder %s129, %s145
      %p147 = scmp.eq.s32.totalorder %s32, 0
      %p148 = por %p146, %p147
      %s149 = ssub.s32 %s26, %s33
      %p150 = scmp.eq.s32.totalorder %s149, 0
      %s152 = sadd.s32 %s151, 1
      %s153 = scalar_select %p150, %s151, %s152
      %p156 = pneg %p150
      %p157 = scmp.eq.s32.totalorder %s26, 1
      %p158 = por %p156, %p157
      %p159 = scmp.ne.s32.totalorder %s151, %s154
      %p160 = scmp.eq.s32.totalorder %s26, 0
      %p161 = por %p159, %p160
      %p162 = scmp.ne.s32.totalorder %s151, %s154
      %p163 = scmp.eq.s32.totalorder %s31, 1
      %p164 = por %p162, %p163
      %p165 = scmp.ne.s32.totalorder %s154, %s155
      %p166 = scmp.eq.s32.totalorder %s31, 0
      %p167 = por %p165, %p166
      %p168 = scmp.ne.s32.totalorder %s154, %s155
      %p169 = scmp.eq.s32.totalorder %s32, 1
      %p170 = por %p168, %p169
      %p172 = scmp.ne.s32.totalorder %s155, %s171
      %p173 = scmp.eq.s32.totalorder %s32, 0
      %p174 = por %p172, %p173
      %p175 = scmp.le.s32.totalorder 1, %s26
      %p176 = scmp.lt.s32.totalorder %s26, 3
      %p177 = pnand %p175, %p176
      %p178 = pneg %p177
      // Predicated region
      $region9: #{tpu_custom_call.1} parent=5 // pred_check
        _
      $region10: #{tpu_custom_call.1} parent=5 // pred_check_branch
        %180 = sbr.rel (%p177) target = $region12
      $region11: #{tpu_custom_call.1} parent=5 // pred_region
        %s181 = ssub.s32 %s26, 1
        // Predicated region
        $region13: #{tpu_custom_call.1} parent=11 // pred_check
          %p182 = pneg %p73
        $region14: #{tpu_custom_call.1} parent=11 // pred_check_branch
          %184 = sbr.rel (%p182) target = $region16
        $region15: #{tpu_custom_call.1} parent=11 // pred_region
          %s186 = ssub.s32 640, 640
          %187 = vsyncadd [#allocation8], %s186
          %s188 = sshll.u32 [#allocation7], 4
          %s189 = int_to_ptr.vmem [resolvable:$true] %s188
          %194 = dma.hbm_to_vmem [thread:$0]  %s2, 640, %s189, [#allocation8], 128, 128, 8
        $region16: #{tpu_custom_call.1} parent=11 // pred_fallthru
          _
        // Predicated region
        $region17: #{tpu_custom_call.1} parent=11 // pred_check
          %p195 = pneg %p94
        $region18: #{tpu_custom_call.1} parent=11 // pred_check_branch
          %197 = sbr.rel (%p195) target = $region20
        $region19: #{tpu_custom_call.1} parent=11 // pred_region
          _
        $region20: #{tpu_custom_call.1} parent=11 // pred_fallthru
          _
        // Predicated region
        $region21: #{tpu_custom_call.1} parent=11 // pred_check
          %p198 = pneg %p115
        $region22: #{tpu_custom_call.1} parent=11 // pred_check_branch
          %200 = sbr.rel (%p198) target = $region24
        $region23: #{tpu_custom_call.1} parent=11 // pred_region
          _
        $region24: #{tpu_custom_call.1} parent=11 // pred_fallthru
          _
      $region12: #{tpu_custom_call.1} parent=5 // pred_fallthru
        _
      %p201 = scmp.lt.s32.totalorder %s26, 2
      // Predicated region
      $region25: #{tpu_custom_call.1} parent=5 // pred_check
        %p202 = pneg %p201
      $region26: #{tpu_custom_call.1} parent=5 // pred_check_branch
        %204 = sbr.rel (%p202) target = $region28
      $region27: #{tpu_custom_call.1} parent=5 // pred_region
        // Predicated region
        $region29: #{tpu_custom_call.1} parent=27 // pred_check
          %p205 = pneg %p46
        $region30: #{tpu_custom_call.1} parent=27 // pred_check_branch
          %207 = sbr.rel (%p205) target = $region32
        $region31: #{tpu_custom_call.1} parent=27 // pred_region
          %s208 = sand.u32 %s36, 1
          %s209 = scalar_lea.sflag [#allocation5], %s208
          %s210 = sand.u32 %s36, 1
          %s211 = smul.addr %s210, 16
          %s212 = scalar_lea.vmem [#allocation4], %s211
          %s214 = ssub.s32 256, 256
          %215 = vsyncadd %s209, %s214
          %s216 = smul.addr %s26, 2
          %s217 = smul.addr %s216, 128
          %s218 = scalar_lea.hbm %s1, %s217
          %s220 = sshll.u32 %s212, 4
          %s221 = int_to_ptr.vmem [resolvable:$true] %s220
          %223 = dma.hbm_to_vmem [thread:$0]  %s218, 256, %s221, %s209
        $region32: #{tpu_custom_call.1} parent=27 // pred_fallthru
          _
      $region28: #{tpu_custom_call.1} parent=5 // pred_fallthru
        _
      %p224 = scmp.le.s32.totalorder 1, %s26
      %p225 = scmp.lt.s32.totalorder %s26, 3
      %p226 = pnand %p224, %p225
      %p227 = pneg %p226
      // Predicated region
      $region33: #{tpu_custom_call.1} parent=5 // pred_check
        _
      $region34: #{tpu_custom_call.1} parent=5 // pred_check_branch
        %229 = sbr.rel (%p226) target = $region36
      $region35: #{tpu_custom_call.1} parent=5 // pred_region
        %s230 = ssub.s32 %s26, 1
        %s231 = sand.u32 %s39, 1
        %s232 = scalar_lea.sflag [#allocation5], %s231
        %s233 = sand.u32 %s39, 1
        %s234 = smul.addr %s233, 16
        %s235 = scalar_lea.vmem [#allocation4], %s234
        // Predicated region
        $region37: #{tpu_custom_call.1} parent=35 // pred_check
          %p236 = pneg %p52
        $region38: #{tpu_custom_call.1} parent=35 // pred_check_branch
          %238 = sbr.rel (%p236) target = $region40
        $region39: #{tpu_custom_call.1} parent=35 // pred_region
          %239 = dma.done %s232, 256
        $region40: #{tpu_custom_call.1} parent=35 // pred_fallthru
          _
        // Predicated region
        $region41: #{tpu_custom_call.1} parent=35 // pred_check
          %p240 = pneg %p73
        $region42: #{tpu_custom_call.1} parent=35 // pred_check_branch
          %242 = sbr.rel (%p240) target = $region44
        $region43: #{tpu_custom_call.1} parent=35 // pred_region
          %243 = dma.done [#allocation8], 640
        $region44: #{tpu_custom_call.1} parent=35 // pred_fallthru
          _
        %s244 = sand.u32 %s39, 1
        %s245 = scalar_lea.sflag [#allocation5], %s244
        %s246 = sand.u32 %s39, 1
        %s247 = smul.addr %s246, 16
        %s248 = scalar_lea.vmem [#allocation4], %s247
        %p249 = pneg %p52
        %p250 = pneg %p49
        %p251 = pneg %p73
        %p252 = pneg %p70
        %p253 = pneg %p94
        %p254 = pneg %p91
        %p255 = pneg %p115
        %p256 = pneg %p112
        %p257 = pneg %p141
        %p258 = pneg %p138
        %s259 = sand.u32 %s128, 1
        %s260 = scalar_lea.sflag [#allocation6], %s259
        %s261 = sand.u32 %s128, 1
        %s262 = smul.addr %s261, 8
        %s263 = scalar_lea.vmem [#allocation9], %s262
        %p264 = pneg %p167
        %p265 = pneg %p164
        %p266 = scmp.lt.s32.totalorder %s31, 1
        %s267 = scalar_select %p266, %s31, 1
        %s268 = scalar_lea.vmem %s6, %s267
        %p269 = scmp.lt.s32.totalorder %s31, 1
        %s270 = scalar_select %p269, %s31, 1
        %s271 = scalar_lea.vmem %s6, %s270
        %v272 = vld [vmem:[%s3] sm:$0xff]
        %v273 = vld [vmem:[#allocation7] sm:$0xff]
        %s274 = scalar_lea.vmem [#allocation7], 8
        %v275 = vld [vmem:[%s274] sm:$0xff]
        %s276 = scalar_lea.vmem [#allocation7], 16
        %v277 = vld [vmem:[%s276] sm:$0xff]
        %s278 = scalar_lea.vmem [#allocation7], 24
        %v279 = vld [vmem:[%s278] sm:$0xff]
        %s280 = scalar_lea.vmem [#allocation7], 32
        %v281 = vld [vmem:[%s280] sm:$0xff]
        %v282 = vld [vmem:[%s235] sm:$0xff]
        %v283 = vld [vmem:[%s235 + $0x8] sm:$0xff]
        %vm284 = vcmask 64512
        %v286 = vsel %vm284, %v273, 0
        %288 = vmatprep.subr.mxu0 0.0
        %289 = vmatpush1.msra.mxu0 0.0
        %290 = vmatprep.subr.mxu0 0.0
        %291 = vmatpush1.msra.mxu0 0.0
        %292 = vmatprep.subr.mxu0 0.0
        %293 = vmatpush1.msra.mxu0 0.0
        %294 = vmatprep.subr.mxu0 0.0
        %295 = vmatpush1.msra.mxu0 0.0
        %296 = vmatprep.subr.mxu0 0.0
        %297 = vmatpush1.msra.mxu0 0.0
        %298 = vmatprep.subr.mxu0 0.0
        %299 = vmatpush1.msra.mxu0 0.0
        %300 = vmatprep.subr.mxu0 0.0
        %301 = vmatpush1.msra.mxu0 0.0
        %302 = vmatprep.subr.mxu0 0.0
        %303 = vmatpush1.msra.mxu0 0.0
        %304 = vmatprep.subr.mxu0 0.0
        %305 = vmatpush1.msra.mxu0 0.0
        %306 = vmatprep.subr.mxu0 0.0
        %307 = vmatpush1.msra.mxu0 0.0
        %308 = vmatprep.subr.mxu0 0.0
        %309 = vmatpush1.msra.mxu0 0.0
        %310 = vmatprep.subr.mxu0 0.0
        %311 = vmatpush1.msra.mxu0 0.0
        %312 = vmatprep.subr.mxu0 0.0
        %313 = vmatpush1.msra.mxu0 0.0
        %314 = vmatprep.subr.mxu0 0.0
        %315 = vmatpush1.msra.mxu0 0.0
        %316 = vmatprep.subr.mxu0 0.0
        %317 = vmatpush1.msra.mxu0 0.0
        %318 = vmatprep.subr.mxu0 %v283
        %319 = vmatpush1.msra.mxu0 %v282
        %320 = vmatprep.subr.mxu0 0.0
        %321 = vmatpush2.msra.mxu0 0.0
        %322 = vmatprep.subr.mxu0 0.0
        %323 = vmatpush2.msra.mxu0 0.0
        %324 = vmatprep.subr.mxu0 0.0
        %325 = vmatpush2.msra.mxu0 0.0
        %326 = vmatprep.subr.mxu0 0.0
        %327 = vmatpush2.msra.mxu0 0.0
        %328 = vmatprep.subr.mxu0 0.0
        %329 = vmatpush2.msra.mxu0 0.0
        %330 = vmatprep.subr.mxu0 0.0
        %331 = vmatpush2.msra.mxu0 0.0
        %332 = vmatprep.subr.mxu0 0.0
        %333 = vmatpush2.msra.mxu0 0.0
        %334 = vmatprep.subr.mxu0 0.0
        %335 = vmatpush2.msra.mxu0 0.0
        %336 = vmatprep.subr.mxu0 0.0
        %337 = vmatpush2.msra.mxu0 0.0
        %338 = vmatprep.subr.mxu0 0.0
        %339 = vmatpush2.msra.mxu0 0.0
        %340 = vmatprep.subr.mxu0 0.0
        %341 = vmatpush2.msra.mxu0 0.0
        %342 = vmatprep.subr.mxu0 0.0
        %343 = vmatpush2.msra.mxu0 0.0
        %344 = vmatprep.subr.mxu0 0.0
        %345 = vmatpush2.msra.mxu0 0.0
        %346 = vmatprep.subr.mxu0 0.0
        %347 = vmatpush2.msra.mxu0 0.0
        %348 = vmatprep.subr.mxu0 0.0
        %349 = vmatpush2.msra.mxu0 0.0
        %350 = vmatprep.subr.mxu0 0.0
        %351 = vmatpush2.msra.mxu0 0.0
        %352 = vmatprep.mubr.f32.mxu0 0.0
        %353 = vmatmul.mubr.f32.gmra.mxu0 %v286
        %v354 = vpop.f32.mrf.mxu0
        %v355 = vadd.f32 0.0, %v354
        %v356 = vpop.f32.mrf.mxu0
        %357 = vdwg.mxu0
        %v359 = vsel %vm284, %v275, 0
        %361 = vmatprep.subr.mxu0 0.0
        %362 = vmatpush1.msra.mxu0 0.0
        %363 = vmatprep.subr.mxu0 0.0
        %364 = vmatpush1.msra.mxu0 0.0
        %365 = vmatprep.subr.mxu0 0.0
        %366 = vmatpush1.msra.mxu0 0.0
        %367 = vmatprep.subr.mxu0 0.0
        %368 = vmatpush1.msra.mxu0 0.0
        %369 = vmatprep.subr.mxu0 0.0
        %370 = vmatpush1.msra.mxu0 0.0
        %371 = vmatprep.subr.mxu0 0.0
        %372 = vmatpush1.msra.mxu0 0.0
        %373 = vmatprep.subr.mxu0 0.0
        %374 = vmatpush1.msra.mxu0 0.0
        %375 = vmatprep.subr.mxu0 0.0
        %376 = vmatpush1.msra.mxu0 0.0
        %377 = vmatprep.subr.mxu0 0.0
        %378 = vmatpush1.msra.mxu0 0.0
        %379 = vmatprep.subr.mxu0 0.0
        %380 = vmatpush1.msra.mxu0 0.0
        %381 = vmatprep.subr.mxu0 0.0
        %382 = vmatpush1.msra.mxu0 0.0
        %383 = vmatprep.subr.mxu0 0.0
        %384 = vmatpush1.msra.mxu0 0.0
        %385 = vmatprep.subr.mxu0 0.0
        %386 = vmatpush1.msra.mxu0 0.0
        %387 = vmatprep.subr.mxu0 0.0
        %388 = vmatpush1.msra.mxu0 0.0
        %389 = vmatprep.subr.mxu0 0.0
        %390 = vmatpush1.msra.mxu0 0.0
        %391 = vmatprep.subr.mxu0 %v283
        %392 = vmatpush1.msra.mxu0 %v282
        %393 = vmatprep.subr.mxu0 0.0
        %394 = vmatpush2.msra.mxu0 0.0
        %395 = vmatprep.subr.mxu0 0.0
        %396 = vmatpush2.msra.mxu0 0.0
        %397 = vmatprep.subr.mxu0 0.0
        %398 = vmatpush2.msra.mxu0 0.0
        %399 = vmatprep.subr.mxu0 0.0
        %400 = vmatpush2.msra.mxu0 0.0
        %401 = vmatprep.subr.mxu0 0.0
        %402 = vmatpush2.msra.mxu0 0.0
        %403 = vmatprep.subr.mxu0 0.0
        %404 = vmatpush2.msra.mxu0 0.0
        %405 = vmatprep.subr.mxu0 0.0
        %406 = vmatpush2.msra.mxu0 0.0
        %407 = vmatprep.subr.mxu0 0.0
        %408 = vmatpush2.msra.mxu0 0.0
        %409 = vmatprep.subr.mxu0 0.0
        %410 = vmatpush2.msra.mxu0 0.0
        %411 = vmatprep.subr.mxu0 0.0
        %412 = vmatpush2.msra.mxu0 0.0
        %413 = vmatprep.subr.mxu0 0.0
        %414 = vmatpush2.msra.mxu0 0.0
        %415 = vmatprep.subr.mxu0 0.0
        %416 = vmatpush2.msra.mxu0 0.0
        %417 = vmatprep.subr.mxu0 0.0
        %418 = vmatpush2.msra.mxu0 0.0
        %419 = vmatprep.subr.mxu0 0.0
        %420 = vmatpush2.msra.mxu0 0.0
        %421 = vmatprep.subr.mxu0 0.0
        %422 = vmatpush2.msra.mxu0 0.0
        %423 = vmatprep.subr.mxu0 0.0
        %424 = vmatpush2.msra.mxu0 0.0
        %425 = vmatprep.mubr.f32.mxu0 0.0
        %426 = vmatmul.mubr.f32.gmra.mxu0 %v359
        %v427 = vpop.f32.mrf.mxu0
        %v428 = vadd.f32 0.0, %v427
        %v429 = vpop.f32.mrf.mxu0
        %v430 = vadd.f32 0.0, %v429
        %431 = vdwg.mxu0
        %434 = vrot.lane.b32.xlu0 %v428, 127
        %v435 = vpop.permute.xlu0 %434
        %436 = vrot.lane.b32.xlu0 %v430, 127
        %v437 = vpop.permute.xlu0 %436
        %vm438 = vcmask 1039360
        %v439 = vsel %vm438, %v435, %v437
        %v441 = vadd.f32 %v355, %v439
        %v443 = vsel %vm284, %v277, 0
        %445 = vmatprep.subr.mxu0 0.0
        %446 = vmatpush1.msra.mxu0 0.0
        %447 = vmatprep.subr.mxu0 0.0
        %448 = vmatpush1.msra.mxu0 0.0
        %449 = vmatprep.subr.mxu0 0.0
        %450 = vmatpush1.msra.mxu0 0.0
        %451 = vmatprep.subr.mxu0 0.0
        %452 = vmatpush1.msra.mxu0 0.0
        %453 = vmatprep.subr.mxu0 0.0
        %454 = vmatpush1.msra.mxu0 0.0
        %455 = vmatprep.subr.mxu0 0.0
        %456 = vmatpush1.msra.mxu0 0.0
        %457 = vmatprep.subr.mxu0 0.0
        %458 = vmatpush1.msra.mxu0 0.0
        %459 = vmatprep.subr.mxu0 0.0
        %460 = vmatpush1.msra.mxu0 0.0
        %461 = vmatprep.subr.mxu0 0.0
        %462 = vmatpush1.msra.mxu0 0.0
        %463 = vmatprep.subr.mxu0 0.0
        %464 = vmatpush1.msra.mxu0 0.0
        %465 = vmatprep.subr.mxu0 0.0
        %466 = vmatpush1.msra.mxu0 0.0
        %467 = vmatprep.subr.mxu0 0.0
        %468 = vmatpush1.msra.mxu0 0.0
        %469 = vmatprep.subr.mxu0 0.0
        %470 = vmatpush1.msra.mxu0 0.0
        %471 = vmatprep.subr.mxu0 0.0
        %472 = vmatpush1.msra.mxu0 0.0
        %473 = vmatprep.subr.mxu0 0.0
        %474 = vmatpush1.msra.mxu0 0.0
        %475 = vmatprep.subr.mxu0 %v283
        %476 = vmatpush1.msra.mxu0 %v282
        %477 = vmatprep.subr.mxu0 0.0
        %478 = vmatpush2.msra.mxu0 0.0
        %479 = vmatprep.subr.mxu0 0.0
        %480 = vmatpush2.msra.mxu0 0.0
        %481 = vmatprep.subr.mxu0 0.0
        %482 = vmatpush2.msra.mxu0 0.0
        %483 = vmatprep.subr.mxu0 0.0
        %484 = vmatpush2.msra.mxu0 0.0
        %485 = vmatprep.subr.mxu0 0.0
        %486 = vmatpush2.msra.mxu0 0.0
        %487 = vmatprep.subr.mxu0 0.0
        %488 = vmatpush2.msra.mxu0 0.0
        %489 = vmatprep.subr.mxu0 0.0
        %490 = vmatpush2.msra.mxu0 0.0
        %491 = vmatprep.subr.mxu0 0.0
        %492 = vmatpush2.msra.mxu0 0.0
        %493 = vmatprep.subr.mxu0 0.0
        %494 = vmatpush2.msra.mxu0 0.0
        %495 = vmatprep.subr.mxu0 0.0
        %496 = vmatpush2.msra.mxu0 0.0
        %497 = vmatprep.subr.mxu0 0.0
        %498 = vmatpush2.msra.mxu0 0.0
        %499 = vmatprep.subr.mxu0 0.0
        %500 = vmatpush2.msra.mxu0 0.0
        %501 = vmatprep.subr.mxu0 0.0
        %502 = vmatpush2.msra.mxu0 0.0
        %503 = vmatprep.subr.mxu0 0.0
        %504 = vmatpush2.msra.mxu0 0.0
        %505 = vmatprep.subr.mxu0 0.0
        %506 = vmatpush2.msra.mxu0 0.0
        %507 = vmatprep.subr.mxu0 0.0
        %508 = vmatpush2.msra.mxu0 0.0
        %509 = vmatprep.mubr.f32.mxu0 0.0
        %510 = vmatmul.mubr.f32.gmra.mxu0 %v443
        %v511 = vpop.f32.mrf.mxu0
        %v512 = vadd.f32 0.0, %v511
        %v513 = vpop.f32.mrf.mxu0
        %v514 = vadd.f32 0.0, %v513
        %515 = vdwg.mxu0
        %518 = vrot.lane.b32.xlu0 %v512, 126
        %v519 = vpop.permute.xlu0 %518
        %520 = vrot.lane.b32.xlu0 %v514, 126
        %v521 = vpop.permute.xlu0 %520
        %vm522 = vcmask 1031168
        %v523 = vsel %vm522, %v519, %v521
        %v525 = vadd.f32 %v441, %v523
        %v527 = vsel %vm284, %v279, 0
        %529 = vmatprep.subr.mxu0 0.0
        %530 = vmatpush1.msra.mxu0 0.0
        %531 = vmatprep.subr.mxu0 0.0
        %532 = vmatpush1.msra.mxu0 0.0
        %533 = vmatprep.subr.mxu0 0.0
        %534 = vmatpush1.msra.mxu0 0.0
        %535 = vmatprep.subr.mxu0 0.0
        %536 = vmatpush1.msra.mxu0 0.0
        %537 = vmatprep.subr.mxu0 0.0
        %538 = vmatpush1.msra.mxu0 0.0
        %539 = vmatprep.subr.mxu0 0.0
        %540 = vmatpush1.msra.mxu0 0.0
        %541 = vmatprep.subr.mxu0 0.0
        %542 = vmatpush1.msra.mxu0 0.0
        %543 = vmatprep.subr.mxu0 0.0
        %544 = vmatpush1.msra.mxu0 0.0
        %545 = vmatprep.subr.mxu0 0.0
        %546 = vmatpush1.msra.mxu0 0.0
        %547 = vmatprep.subr.mxu0 0.0
        %548 = vmatpush1.msra.mxu0 0.0
        %549 = vmatprep.subr.mxu0 0.0
        %550 = vmatpush1.msra.mxu0 0.0
        %551 = vmatprep.subr.mxu0 0.0
        %552 = vmatpush1.msra.mxu0 0.0
        %553 = vmatprep.subr.mxu0 0.0
        %554 = vmatpush1.msra.mxu0 0.0
        %555 = vmatprep.subr.mxu0 0.0
        %556 = vmatpush1.msra.mxu0 0.0
        %557 = vmatprep.subr.mxu0 0.0
        %558 = vmatpush1.msra.mxu0 0.0
        %559 = vmatprep.subr.mxu0 %v283
        %560 = vmatpush1.msra.mxu0 %v282
        %561 = vmatprep.subr.mxu0 0.0
        %562 = vmatpush2.msra.mxu0 0.0
        %563 = vmatprep.subr.mxu0 0.0
        %564 = vmatpush2.msra.mxu0 0.0
        %565 = vmatprep.subr.mxu0 0.0
        %566 = vmatpush2.msra.mxu0 0.0
        %567 = vmatprep.subr.mxu0 0.0
        %568 = vmatpush2.msra.mxu0 0.0
        %569 = vmatprep.subr.mxu0 0.0
        %570 = vmatpush2.msra.mxu0 0.0
        %571 = vmatprep.subr.mxu0 0.0
        %572 = vmatpush2.msra.mxu0 0.0
        %573 = vmatprep.subr.mxu0 0.0
        %574 = vmatpush2.msra.mxu0 0.0
        %575 = vmatprep.subr.mxu0 0.0
        %576 = vmatpush2.msra.mxu0 0.0
        %577 = vmatprep.subr.mxu0 0.0
        %578 = vmatpush2.msra.mxu0 0.0
        %579 = vmatprep.subr.mxu0 0.0
        %580 = vmatpush2.msra.mxu0 0.0
        %581 = vmatprep.subr.mxu0 0.0
        %582 = vmatpush2.msra.mxu0 0.0
        %583 = vmatprep.subr.mxu0 0.0
        %584 = vmatpush2.msra.mxu0 0.0
        %585 = vmatprep.subr.mxu0 0.0
        %586 = vmatpush2.msra.mxu0 0.0
        %587 = vmatprep.subr.mxu0 0.0
        %588 = vmatpush2.msra.mxu0 0.0
        %589 = vmatprep.subr.mxu0 0.0
        %590 = vmatpush2.msra.mxu0 0.0
        %591 = vmatprep.subr.mxu0 0.0
        %592 = vmatpush2.msra.mxu0 0.0
        %593 = vmatprep.mubr.f32.mxu0 0.0
        %594 = vmatmul.mubr.f32.gmra.mxu0 %v527
        %v595 = vpop.f32.mrf.mxu0
        %v596 = vadd.f32 0.0, %v595
        %v597 = vpop.f32.mrf.mxu0
        %v598 = vadd.f32 0.0, %v597
        %599 = vdwg.mxu0
        %602 = vrot.lane.b32.xlu0 %v596, 125
        %v603 = vpop.permute.xlu0 %602
        %604 = vrot.lane.b32.xlu0 %v598, 125
        %v605 = vpop.permute.xlu0 %604
        %vm606 = vcmask 1022976
        %v607 = vsel %vm606, %v603, %v605
        %v609 = vadd.f32 %v525, %v607
        %v611 = vsel %vm284, %v281, 0
        %613 = vmatprep.subr.mxu0 0.0
        %614 = vmatpush1.msra.mxu0 0.0
        %615 = vmatprep.subr.mxu0 0.0
        %616 = vmatpush1.msra.mxu0 0.0
        %617 = vmatprep.subr.mxu0 0.0
        %618 = vmatpush1.msra.mxu0 0.0
        %619 = vmatprep.subr.mxu0 0.0
        %620 = vmatpush1.msra.mxu0 0.0
        %621 = vmatprep.subr.mxu0 0.0
        %622 = vmatpush1.msra.mxu0 0.0
        %623 = vmatprep.subr.mxu0 0.0
        %624 = vmatpush1.msra.mxu0 0.0
        %625 = vmatprep.subr.mxu0 0.0
        %626 = vmatpush1.msra.mxu0 0.0
        %627 = vmatprep.subr.mxu0 0.0
        %628 = vmatpush1.msra.mxu0 0.0
        %629 = vmatprep.subr.mxu0 0.0
        %630 = vmatpush1.msra.mxu0 0.0
        %631 = vmatprep.subr.mxu0 0.0
        %632 = vmatpush1.msra.mxu0 0.0
        %633 = vmatprep.subr.mxu0 0.0
        %634 = vmatpush1.msra.mxu0 0.0
        %635 = vmatprep.subr.mxu0 0.0
        %636 = vmatpush1.msra.mxu0 0.0
        %637 = vmatprep.subr.mxu0 0.0
        %638 = vmatpush1.msra.mxu0 0.0
        %639 = vmatprep.subr.mxu0 0.0
        %640 = vmatpush1.msra.mxu0 0.0
        %641 = vmatprep.subr.mxu0 0.0
        %642 = vmatpush1.msra.mxu0 0.0
        %643 = vmatprep.subr.mxu0 %v283
        %644 = vmatpush1.msra.mxu0 %v282
        %645 = vmatprep.subr.mxu0 0.0
        %646 = vmatpush2.msra.mxu0 0.0
        %647 = vmatprep.subr.mxu0 0.0
        %648 = vmatpush2.msra.mxu0 0.0
        %649 = vmatprep.subr.mxu0 0.0
        %650 = vmatpush2.msra.mxu0 0.0
        %651 = vmatprep.subr.mxu0 0.0
        %652 = vmatpush2.msra.mxu0 0.0
        %653 = vmatprep.subr.mxu0 0.0
        %654 = vmatpush2.msra.mxu0 0.0
        %655 = vmatprep.subr.mxu0 0.0
        %656 = vmatpush2.msra.mxu0 0.0
        %657 = vmatprep.subr.mxu0 0.0
        %658 = vmatpush2.msra.mxu0 0.0
        %659 = vmatprep.subr.mxu0 0.0
        %660 = vmatpush2.msra.mxu0 0.0
        %661 = vmatprep.subr.mxu0 0.0
        %662 = vmatpush2.msra.mxu0 0.0
        %663 = vmatprep.subr.mxu0 0.0
        %664 = vmatpush2.msra.mxu0 0.0
        %665 = vmatprep.subr.mxu0 0.0
        %666 = vmatpush2.msra.mxu0 0.0
        %667 = vmatprep.subr.mxu0 0.0
        %668 = vmatpush2.msra.mxu0 0.0
        %669 = vmatprep.subr.mxu0 0.0
        %670 = vmatpush2.msra.mxu0 0.0
        %671 = vmatprep.subr.mxu0 0.0
        %672 = vmatpush2.msra.mxu0 0.0
        %673 = vmatprep.subr.mxu0 0.0
        %674 = vmatpush2.msra.mxu0 0.0
        %675 = vmatprep.subr.mxu0 0.0
        %676 = vmatpush2.msra.mxu0 0.0
        %677 = vmatprep.mubr.f32.mxu0 0.0
        %678 = vmatmul.mubr.f32.gmra.mxu0 %v611
        %v679 = vpop.f32.mrf.mxu0
        %v680 = vadd.f32 0.0, %v679
        %v681 = vpop.f32.mrf.mxu0
        %v682 = vadd.f32 0.0, %v681
        %683 = vdwg.mxu0
        %686 = vrot.lane.b32.xlu0 %v680, 124
        %v687 = vpop.permute.xlu0 %686
        %688 = vrot.lane.b32.xlu0 %v682, 124
        %v689 = vpop.permute.xlu0 %688
        %vm690 = vcmask 1014784
        %v691 = vsel %vm690, %v687, %v689
        %v693 = vadd.f32 %v609, %v691
        %s694 = sld [smem:[#allocation3 + %s31]]
        %696 = vset.pattern.permute.xlu0 0
        %697 = vperm.xlu0 %696, %v272
        %v698 = vpop.permute.xlu0 %697
        %v700 = vadd.f32 %v693, %v698
        %v701 = vstv %s694
        %v702 = vmul.f32 %v700, %v701
        %703 = vst [vmem:[%s263] sm:$0xff] %v702
        %v704 = vld [vmem:[%s235] sm:$0xff]
        %v705 = vld [vmem:[%s235 + $0x8] sm:$0xff]
        %vm706 = vcmask 31744
        %v707 = vsel %vm706, %v705, 0.0
        %v708 = vadd.f32 %v704, %v707
        %709 = vadd.xlane.f32.xlu0 %v708
        %v710 = vpop.xlane.xlu0 %709
        %v711 = vld [vmem:[%s4] sm:$0xff]
        %v713 = vlaneseq
        %v714 = vand.u32 %v713, 127
        %v715 = vlaneseq
        %v716 = vshrl.u32 %v715, 7
        %v717 = vsub.s32 %v714, %v716
        %v718 = vrot.slane %v710, %v717
        %v719 = vsel %vm284, %v718, 0
        %721 = vmatprep.subr.mxu0 0.0
        %722 = vmatpush1.msra.mxu0 0.0
        %723 = vmatprep.subr.mxu0 0.0
        %724 = vmatpush1.msra.mxu0 0.0
        %725 = vmatprep.subr.mxu0 0.0
        %726 = vmatpush1.msra.mxu0 0.0
        %727 = vmatprep.subr.mxu0 0.0
        %728 = vmatpush1.msra.mxu0 0.0
        %729 = vmatprep.subr.mxu0 0.0
        %730 = vmatpush1.msra.mxu0 0.0
        %731 = vmatprep.subr.mxu0 0.0
        %732 = vmatpush1.msra.mxu0 0.0
        %733 = vmatprep.subr.mxu0 0.0
        %734 = vmatpush1.msra.mxu0 0.0
        %735 = vmatprep.subr.mxu0 0.0
        %736 = vmatpush1.msra.mxu0 0.0
        %737 = vmatprep.subr.mxu0 0.0
        %738 = vmatpush1.msra.mxu0 0.0
        %739 = vmatprep.subr.mxu0 0.0
        %740 = vmatpush1.msra.mxu0 0.0
        %741 = vmatprep.subr.mxu0 0.0
        %742 = vmatpush1.msra.mxu0 0.0
        %743 = vmatprep.subr.mxu0 0.0
        %744 = vmatpush1.msra.mxu0 0.0
        %745 = vmatprep.subr.mxu0 0.0
        %746 = vmatpush1.msra.mxu0 0.0
        %747 = vmatprep.subr.mxu0 0.0
        %748 = vmatpush1.msra.mxu0 0.0
        %749 = vmatprep.subr.mxu0 0.0
        %750 = vmatpush1.msra.mxu0 0.0
        %751 = vmatprep.subr.mxu0 0.0
        %752 = vmatpush1.msra.mxu0 %v711
        %753 = vmatprep.subr.mxu0 0.0
        %754 = vmatpush2.msra.mxu0 0.0
        %755 = vmatprep.subr.mxu0 0.0
        %756 = vmatpush2.msra.mxu0 0.0
        %757 = vmatprep.subr.mxu0 0.0
        %758 = vmatpush2.msra.mxu0 0.0
        %759 = vmatprep.subr.mxu0 0.0
        %760 = vmatpush2.msra.mxu0 0.0
        %761 = vmatprep.subr.mxu0 0.0
        %762 = vmatpush2.msra.mxu0 0.0
        %763 = vmatprep.subr.mxu0 0.0
        %764 = vmatpush2.msra.mxu0 0.0
        %765 = vmatprep.subr.mxu0 0.0
        %766 = vmatpush2.msra.mxu0 0.0
        %767 = vmatprep.subr.mxu0 0.0
        %768 = vmatpush2.msra.mxu0 0.0
        %769 = vmatprep.subr.mxu0 0.0
        %770 = vmatpush2.msra.mxu0 0.0
        %771 = vmatprep.subr.mxu0 0.0
        %772 = vmatpush2.msra.mxu0 0.0
        %773 = vmatprep.subr.mxu0 0.0
        %774 = vmatpush2.msra.mxu0 0.0
        %775 = vmatprep.subr.mxu0 0.0
        %776 = vmatpush2.msra.mxu0 0.0
        %777 = vmatprep.subr.mxu0 0.0
        %778 = vmatpush2.msra.mxu0 0.0
        %779 = vmatprep.subr.mxu0 0.0
        %780 = vmatpush2.msra.mxu0 0.0
        %781 = vmatprep.subr.mxu0 0.0
        %782 = vmatpush2.msra.mxu0 0.0
        %783 = vmatprep.subr.mxu0 0.0
        %784 = vmatpush2.msra.mxu0 0.0
        %785 = vmatprep.mubr.f32.mxu0 0.0
        %786 = vmatmul.mubr.f32.gmra.mxu0 %v719
        %v787 = vpop.f32.mrf.mxu0
        %v788 = vadd.f32 0.0, %v787
        %v789 = vpop.f32.mrf.mxu0
        %790 = vdwg.mxu0
        %v791 = vmul.f32 %v788, 0.0625
        %vm792 = vcmask 0
        %793 = vst.msk [vmem:[%s271] sm:$0x1] %vm792, %v791
        %s794 = sand.u32 %s128, 1
        %s795 = scalar_lea.sflag [#allocation6], %s794
        %s796 = sand.u32 %s128, 1
        %s797 = smul.addr %s796, 8
        %s798 = scalar_lea.vmem [#allocation9], %s797
        %p799 = scmp.lt.s32.totalorder %s31, 1
        %s800 = scalar_select %p799, %s31, 1
        %s801 = scalar_lea.vmem %s6, %s800
        // Predicated region
        $region45: #{tpu_custom_call.1} parent=35 // pred_check
          %p802 = pneg %p138
        $region46: #{tpu_custom_call.1} parent=35 // pred_check_branch
          %804 = sbr.rel (%p802) target = $region48
        $region47: #{tpu_custom_call.1} parent=35 // pred_region
          %s806 = ssub.s32 128, 128
          %807 = vsyncadd %s795, %s806
          %s808 = smul.addr %s31, 128
          %s809 = scalar_lea.hbm %s5, %s808
          %s811 = sshll.u32 %s798, 4
          %s812 = int_to_ptr.vmem [resolvable:$true] %s811
          %814 = dma.vmem_to_hbm [thread:$0]  %s812, 128, %s809, %s795
        $region48: #{tpu_custom_call.1} parent=35 // pred_fallthru
          _
        // Predicated region
        $region49: #{tpu_custom_call.1} parent=35 // pred_check
          %p815 = pneg %p164
        $region50: #{tpu_custom_call.1} parent=35 // pred_check_branch
          %817 = sbr.rel (%p815) target = $region52
        $region51: #{tpu_custom_call.1} parent=35 // pred_region
          _
        $region52: #{tpu_custom_call.1} parent=35 // pred_fallthru
          _
      $region36: #{tpu_custom_call.1} parent=5 // pred_fallthru
        _
      %p818 = scmp.le.s32.totalorder 2, %s26
      // Predicated region
      $region53: #{tpu_custom_call.1} parent=5 // pred_check
        %p819 = pneg %p818
      $region54: #{tpu_custom_call.1} parent=5 // pred_check_branch
        %821 = sbr.rel (%p819) target = $region56
      $region55: #{tpu_custom_call.1} parent=5 // pred_region
        %s822 = ssub.s32 %s26, 2
        // Predicated region
        $region57: #{tpu_custom_call.1} parent=55 // pred_check
          %p823 = pneg %p144
        $region58: #{tpu_custom_call.1} parent=55 // pred_check_branch
          %825 = sbr.rel (%p823) target = $region60
        $region59: #{tpu_custom_call.1} parent=55 // pred_region
          %s826 = sand.u32 %s129, 1
          %s827 = scalar_lea.sflag [#allocation6], %s826
          %s828 = sand.u32 %s129, 1
          %s829 = smul.addr %s828, 8
          %s830 = scalar_lea.vmem [#allocation9], %s829
          %831 = dma.done %s827, 128
        $region60: #{tpu_custom_call.1} parent=55 // pred_fallthru
          _
        // Predicated region
        $region61: #{tpu_custom_call.1} parent=55 // pred_check
          %p832 = pneg %p170
        $region62: #{tpu_custom_call.1} parent=55 // pred_check_branch
          %834 = sbr.rel (%p832) target = $region64
        $region63: #{tpu_custom_call.1} parent=55 // pred_region
          %p835 = scmp.lt.s32.totalorder %s32, 1
          %s836 = scalar_select %p835, %s32, 1
          %s837 = scalar_lea.vmem %s6, %s836
        $region64: #{tpu_custom_call.1} parent=55 // pred_fallthru
          _
      $region56: #{tpu_custom_call.1} parent=5 // pred_fallthru
        _
    $region6: #{tpu_custom_call.1} parent=1 // loop_footer
      %s30 = sadd.s32 1, %s26
    $region7: #{tpu_custom_call.1} parent=1 // loop_footer_branch
      %25 = sbr.rel target = $region3
    $region8: #{tpu_custom_call.1} parent=1 // loop_exit
      _
    %838 = vsyncpa [#allocation5], 1
    %s839 = scalar_lea.sflag [#allocation5], 1
    %840 = vsyncpa %s839, 1
    %841 = vsyncpa [#allocation8], 1
    %842 = vsyncpa [#allocation6], 1
    %s843 = scalar_lea.sflag [#allocation6], 1
    %844 = vsyncpa %s843, 1

// kernel: tpu_custom_call.1
$region0: #{tpu_custom_call.1}
  #allocation0 [shape = 'u32[]', space=smem, size = 0x4, offset = 0x4, fixed_abs, tag = 'smem constant byte address 0x4 - core index']
  #allocation1 [shape = 'u32[144,128]{1,0:T(1,128)}', space=vmem, size = 0x12000, scoped, tag = 'internal scratch']
  #allocation2 [shape = 's32[1]{0}', space=sflag, size = 0x4, scoped, tag = 'scoped memory for tpu_custom_call.1']
  #allocation3 [shape = 'u8[512]{0}', space=smem, size = 0x200, scoped, tag = 'prefetched SMEM operand 0']
  %s0 = inlined_call_operand.vmem [shape: f32[2], index: 0, kind: input, shape index: {}]
  %s1 = inlined_call_operand.hbm [shape: f32[2,8,132], index: 1, kind: input, shape index: {}]
  %s2 = inlined_call_operand.hbm [shape: f32[5,8,8], index: 2, kind: input, shape index: {}]
  %s3 = inlined_call_operand.vmem [shape: f32[8,1], index: 3, kind: input, shape index: {}]
  %s4 = inlined_call_operand.vmem [shape: f32[8,1], index: 4, kind: input, shape index: {}]
  %s5 = inlined_call_operand.hbm [shape: f32[2,8,128], index: 5, kind: output, shape index: {0}]
  %s6 = inlined_call_operand.vmem [shape: f32[2,1,1], index: 6, kind: output, shape index: {1}]
  %7 = xla_tuple %s5, %s6
  %s8 = sld [smem:[#allocation0]]
  $region65: #{tpu_custom_call.1} parent=0
    _
  %s10 = ssub.s32 1, %s8
  %s11 = scalar_select 0, %s10, %s8
  %s12 = sshll.u32 %s0, 4
  %s13 = int_to_ptr.vmem [resolvable:$true] %s12
  %15 = dma.vmem_to_smem %s13, 16, [#allocation3], [#allocation2]
  %16 = dma.done [#allocation2], 16
  %17 = sfence
  $region1: #{tpu_custom_call.1} parent=0
    #allocation4 [shape = 'u8[16384]{0}', space=vmem, size = 0x4000, scoped, tag = 'input window, operand 1']
    #allocation5 [shape = 's32[2]{0}', space=sflag, size = 0x8, scoped, tag = 'scoped memory for tpu_custom_call.1']
    #allocation6 [shape = 's32[2]{0}', space=sflag, size = 0x8, scoped, tag = 'scoped memory for tpu_custom_call.1']
    #allocation7 [shape = 'u8[20480]{0}', space=vmem, size = 0x5000, scoped, tag = 'input window, operand 2, single buffered']
    #allocation8 [shape = 's32[1]{0}', space=sflag, size = 0x4, scoped, tag = 'scoped memory for tpu_custom_call.1']
    #allocation9 [shape = 'u8[8192]{0}', space=vmem, size = 0x2000, scoped, tag = 'output window, operand 0']
    %18 = vsyncpa [#allocation5], 0
    %s19 = scalar_lea.sflag [#allocation5], 1
    %20 = vsyncpa %s19, 0
    %21 = vsyncpa [#allocation8], 0
    %22 = vsyncpa [#allocation6], 0
    %s23 = scalar_lea.sflag [#allocation6], 1
    %24 = vsyncpa %s23, 0
    loop: start=0, step=1, limit=4
    $region2: #{tpu_custom_call.1} parent=1 // loop_pre_header
      _
    $region3: #{tpu_custom_call.1} parent=1 // loop_header
      %s26 = sphi 0, %s30
      %p27 = scmp.ge.s32.totalorder %s26, 4
      %s36 = sphi 0, %s38
      %s39 = sphi 0, %s36
      %s40 = sphi 0, %s39
      %s56 = sphi 0, %s40
      %s60 = sphi 0, %s60
      %s62 = sphi 0, %s60
      %s63 = sphi 0, %s62
      %s77 = sphi 0, %s63
      %s81 = sphi 0, %s81
      %s83 = sphi 0, %s81
      %s84 = sphi 0, %s83
      %s98 = sphi 0, %s84
      %s102 = sphi 0, %s102
      %s104 = sphi 0, %s102
      %s105 = sphi 0, %s104
      %s119 = sphi 0, %s105
      %s125 = sphi 0, %s127
      %s128 = sphi 0, %s125
      %s129 = sphi 0, %s128
      %s145 = sphi 0, %s129
      %s151 = sphi 0, %s153
      %s154 = sphi 0, %s151
      %s155 = sphi 0, %s154
      %s171 = sphi 0, %s155
    $region4: #{tpu_custom_call.1} parent=1 // loop_header_branch
      %29 = sbr.rel (%p27) target = $region8
    $region5: #{tpu_custom_call.1} parent=1 // loop_body
      %s31 = ssub.s32 %s26, 1
      %s32 = ssub.s32 %s26, 2
      %s33 = sadd.s32 %s26, 1
      %s34 = ssub.s32 %s26, %s33
      %p35 = scmp.eq.s32.totalorder %s34, 0
      %s37 = sadd.s32 %s36, 1
      %s38 = scalar_select %p35, %s36, %s37
      %p41 = pneg %p35
      %p42 = scmp.eq.s32.totalorder %s26, 1
      %p43 = por %p41, %p42
      %p44 = scmp.ne.s32.totalorder %s36, %s39
      %p45 = scmp.eq.s32.totalorder %s26, 0
      %p46 = por %p44, %p45
      %p47 = scmp.ne.s32.totalorder %s36, %s39
      %p48 = scmp.eq.s32.totalorder %s31, 1
      %p49 = por %p47, %p48
      %p50 = scmp.ne.s32.totalorder %s39, %s40
      %p51 = scmp.eq.s32.totalorder %s31, 0
      %p52 = por %p50, %p51
      %p53 = scmp.ne.s32.totalorder %s39, %s40
      %p54 = scmp.eq.s32.totalorder %s32, 1
      %p55 = por %p53, %p54
      %p57 = scmp.ne.s32.totalorder %s40, %s56
      %p58 = scmp.eq.s32.totalorder %s32, 0
      %p59 = por %p57, %p58
      %s61 = sadd.s32 %s60, 1
      %p64 = scmp.eq.s32.totalorder %s26, 1
      %p65 = scmp.ne.s32.totalorder %s60, %s62
      %p66 = scmp.eq.s32.totalorder %s26, 0
      %p67 = por %p65, %p66
      %p68 = scmp.ne.s32.totalorder %s60, %s62
      %p69 = scmp.eq.s32.totalorder %s31, 1
      %p70 = por %p68, %p69
      %p71 = scmp.ne.s32.totalorder %s62, %s63
      %p72 = scmp.eq.s32.totalorder %s31, 0
      %p73 = por %p71, %p72
      %p74 = scmp.ne.s32.totalorder %s62, %s63
      %p75 = scmp.eq.s32.totalorder %s32, 1
      %p76 = por %p74, %p75
      %p78 = scmp.ne.s32.totalorder %s63, %s77
      %p79 = scmp.eq.s32.totalorder %s32, 0
      %p80 = por %p78, %p79
      %s82 = sadd.s32 %s81, 1
      %p85 = scmp.eq.s32.totalorder %s26, 1
      %p86 = scmp.ne.s32.totalorder %s81, %s83
      %p87 = scmp.eq.s32.totalorder %s26, 0
      %p88 = por %p86, %p87
      %p89 = scmp.ne.s32.totalorder %s81, %s83
      %p90 = scmp.eq.s32.totalorder %s31, 1
      %p91 = por %p89, %p90
      %p92 = scmp.ne.s32.totalorder %s83, %s84
      %p93 = scmp.eq.s32.totalorder %s31, 0
      %p94 = por %p92, %p93
      %p95 = scmp.ne.s32.totalorder %s83, %s84
      %p96 = scmp.eq.s32.totalorder %s32, 1
      %p97 = por %p95, %p96
      %p99 = scmp.ne.s32.totalorder %s84, %s98
      %p100 = scmp.eq.s32.totalorder %s32, 0
      %p101 = por %p99, %p100
      %s103 = sadd.s32 %s102, 1
      %p106 = scmp.eq.s32.totalorder %s26, 1
      %p107 = scmp.ne.s32.totalorder %s102, %s104
      %p108 = scmp.eq.s32.totalorder %s26, 0
      %p109 = por %p107, %p108
      %p110 = scmp.ne.s32.totalorder %s102, %s104
      %p111 = scmp.eq.s32.totalorder %s31, 1
      %p112 = por %p110, %p111
      %p113 = scmp.ne.s32.totalorder %s104, %s105
      %p114 = scmp.eq.s32.totalorder %s31, 0
      %p115 = por %p113, %p114
      %p116 = scmp.ne.s32.totalorder %s104, %s105
      %p117 = scmp.eq.s32.totalorder %s32, 1
      %p118 = por %p116, %p117
      %p120 = scmp.ne.s32.totalorder %s105, %s119
      %p121 = scmp.eq.s32.totalorder %s32, 0
      %p122 = por %p120, %p121
      %s123 = ssub.s32 %s26, %s33
      %p124 = scmp.eq.s32.totalorder %s123, 0
      %s126 = sadd.s32 %s125, 1
      %s127 = scalar_select %p124, %s125, %s126
      %p130 = pneg %p124
      %p131 = scmp.eq.s32.totalorder %s26, 1
      %p132 = por %p130, %p131
      %p133 = scmp.ne.s32.totalorder %s125, %s128
      %p134 = scmp.eq.s32.totalorder %s26, 0
      %p135 = por %p133, %p134
      %p136 = scmp.ne.s32.totalorder %s125, %s128
      %p137 = scmp.eq.s32.totalorder %s31, 1
      %p138 = por %p136, %p137
      %p139 = scmp.ne.s32.totalorder %s128, %s129
      %p140 = scmp.eq.s32.totalorder %s31, 0
      %p141 = por %p139, %p140
      %p142 = scmp.ne.s32.totalorder %s128, %s129
      %p143 = scmp.eq.s32.totalorder %s32, 1
      %p144 = por %p142, %p143
      %p146 = scmp.ne.s32.totalorder %s129, %s145
      %p147 = scmp.eq.s32.totalorder %s32, 0
      %p148 = por %p146, %p147
      %s149 = ssub.s32 %s26, %s33
      %p150 = scmp.eq.s32.totalorder %s149, 0
      %s152 = sadd.s32 %s151, 1
      %s153 = scalar_select %p150, %s151, %s152
      %p156 = pneg %p150
      %p157 = scmp.eq.s32.totalorder %s26, 1
      %p158 = por %p156, %p157
      %p159 = scmp.ne.s32.totalorder %s151, %s154
      %p160 = scmp.eq.s32.totalorder %s26, 0
      %p161 = por %p159, %p160
      %p162 = scmp.ne.s32.totalorder %s151, %s154
      %p163 = scmp.eq.s32.totalorder %s31, 1
      %p164 = por %p162, %p163
      %p165 = scmp.ne.s32.totalorder %s154, %s155
      %p166 = scmp.eq.s32.totalorder %s31, 0
      %p167 = por %p165, %p166
      %p168 = scmp.ne.s32.totalorder %s154, %s155
      %p169 = scmp.eq.s32.totalorder %s32, 1
      %p170 = por %p168, %p169
      %p172 = scmp.ne.s32.totalorder %s155, %s171
      %p173 = scmp.eq.s32.totalorder %s32, 0
      %p174 = por %p172, %p173
      %p175 = scmp.le.s32.totalorder 1, %s26
      %p176 = scmp.lt.s32.totalorder %s26, 3
      %p177 = pnand %p175, %p176
      %p178 = pneg %p177
      // Predicated region
      $region9: #{tpu_custom_call.1} parent=5 // pred_check
        _
      $region10: #{tpu_custom_call.1} parent=5 // pred_check_branch
        %180 = sbr.rel (%p177) target = $region12
      $region11: #{tpu_custom_call.1} parent=5 // pred_region
        %s181 = ssub.s32 %s26, 1
        // Predicated region
        $region13: #{tpu_custom_call.1} parent=11 // pred_check
          %p182 = pneg %p73
        $region14: #{tpu_custom_call.1} parent=11 // pred_check_branch
          %184 = sbr.rel (%p182) target = $region16
        $region15: #{tpu_custom_call.1} parent=11 // pred_region
          %s186 = ssub.s32 640, 640
          %187 = vsyncadd [#allocation8], %s186
          %s188 = sshll.u32 [#allocation7], 4
          %s189 = int_to_ptr.vmem [resolvable:$true] %s188
          %194 = dma.hbm_to_vmem [thread:$0]  %s2, 640, %s189, [#allocation8], 128, 128, 8
        $region16: #{tpu_custom_call.1} parent=11 // pred_fallthru
          _
        // Predicated region
        $region17: #{tpu_custom_call.1} parent=11 // pred_check
          %p195 = pneg %p94
        $region18: #{tpu_custom_call.1} parent=11 // pred_check_branch
          %197 = sbr.rel (%p195) target = $region20
        $region19: #{tpu_custom_call.1} parent=11 // pred_region
          _
        $region20: #{tpu_custom_call.1} parent=11 // pred_fallthru
          _
        // Predicated region
        $region21: #{tpu_custom_call.1} parent=11 // pred_check
          %p198 = pneg %p115
        $region22: #{tpu_custom_call.1} parent=11 // pred_check_branch
          %200 = sbr.rel (%p198) target = $region24
        $region23: #{tpu_custom_call.1} parent=11 // pred_region
          _
        $region24: #{tpu_custom_call.1} parent=11 // pred_fallthru
          _
      $region12: #{tpu_custom_call.1} parent=5 // pred_fallthru
        _
      %p201 = scmp.lt.s32.totalorder %s26, 2
      // Predicated region
      $region25: #{tpu_custom_call.1} parent=5 // pred_check
        %p202 = pneg %p201
      $region26: #{tpu_custom_call.1} parent=5 // pred_check_branch
        %204 = sbr.rel (%p202) target = $region28
      $region27: #{tpu_custom_call.1} parent=5 // pred_region
        // Predicated region
        $region29: #{tpu_custom_call.1} parent=27 // pred_check
          %p205 = pneg %p46
        $region30: #{tpu_custom_call.1} parent=27 // pred_check_branch
          %207 = sbr.rel (%p205) target = $region32
        $region31: #{tpu_custom_call.1} parent=27 // pred_region
          %s208 = sand.u32 %s36, 1
          %s209 = scalar_lea.sflag [#allocation5], %s208
          %s210 = sand.u32 %s36, 1
          %s211 = smul.addr %s210, 16
          %s212 = scalar_lea.vmem [#allocation4], %s211
          %s214 = ssub.s32 256, 256
          %215 = vsyncadd %s209, %s214
          %s216 = smul.addr %s26, 2
          %s217 = smul.addr %s216, 128
          %s218 = scalar_lea.hbm %s1, %s217
          %s220 = sshll.u32 %s212, 4
          %s221 = int_to_ptr.vmem [resolvable:$true] %s220
          %223 = dma.hbm_to_vmem [thread:$0]  %s218, 256, %s221, %s209
        $region32: #{tpu_custom_call.1} parent=27 // pred_fallthru
          _
      $region28: #{tpu_custom_call.1} parent=5 // pred_fallthru
        _
      %p224 = scmp.le.s32.totalorder 1, %s26
      %p225 = scmp.lt.s32.totalorder %s26, 3
      %p226 = pnand %p224, %p225
      %p227 = pneg %p226
      // Predicated region
      $region33: #{tpu_custom_call.1} parent=5 // pred_check
        _
      $region34: #{tpu_custom_call.1} parent=5 // pred_check_branch
        %229 = sbr.rel (%p226) target = $region36
      $region35: #{tpu_custom_call.1} parent=5 // pred_region
        %s230 = ssub.s32 %s26, 1
        %s231 = sand.u32 %s39, 1
        %s232 = scalar_lea.sflag [#allocation5], %s231
        %s233 = sand.u32 %s39, 1
        %s234 = smul.addr %s233, 16
        %s235 = scalar_lea.vmem [#allocation4], %s234
        // Predicated region
        $region37: #{tpu_custom_call.1} parent=35 // pred_check
          %p236 = pneg %p52
        $region38: #{tpu_custom_call.1} parent=35 // pred_check_branch
          %238 = sbr.rel (%p236) target = $region40
        $region39: #{tpu_custom_call.1} parent=35 // pred_region
          %239 = dma.done %s232, 256
        $region40: #{tpu_custom_call.1} parent=35 // pred_fallthru
          _
        // Predicated region
        $region41: #{tpu_custom_call.1} parent=35 // pred_check
          %p240 = pneg %p73
        $region42: #{tpu_custom_call.1} parent=35 // pred_check_branch
          %242 = sbr.rel (%p240) target = $region44
        $region43: #{tpu_custom_call.1} parent=35 // pred_region
          %243 = dma.done [#allocation8], 640
        $region44: #{tpu_custom_call.1} parent=35 // pred_fallthru
          _
        %s244 = sand.u32 %s39, 1
        %s245 = scalar_lea.sflag [#allocation5], %s244
        %s246 = sand.u32 %s39, 1
        %s247 = smul.addr %s246, 16
        %s248 = scalar_lea.vmem [#allocation4], %s247
        %p249 = pneg %p52
        %p250 = pneg %p49
        %p251 = pneg %p73
        %p252 = pneg %p70
        %p253 = pneg %p94
        %p254 = pneg %p91
        %p255 = pneg %p115
        %p256 = pneg %p112
        %p257 = pneg %p141
        %p258 = pneg %p138
        %s259 = sand.u32 %s128, 1
        %s260 = scalar_lea.sflag [#allocation6], %s259
        %s261 = sand.u32 %s128, 1
        %s262 = smul.addr %s261, 8
        %s263 = scalar_lea.vmem [#allocation9], %s262
        %p264 = pneg %p167
        %p265 = pneg %p164
        %p266 = scmp.lt.s32.totalorder %s31, 1
        %s267 = scalar_select %p266, %s31, 1
        %s268 = scalar_lea.vmem %s6, %s267
        %p269 = scmp.lt.s32.totalorder %s31, 1
        %s270 = scalar_select %p269, %s31, 1
        %s271 = scalar_lea.vmem %s6, %s270
        %v272 = vld [vmem:[%s3] sm:$0xff]
        %v273 = vld [vmem:[#allocation7] sm:$0xff]
        %s274 = scalar_lea.vmem [#allocation7], 8
        %v275 = vld [vmem:[%s274] sm:$0xff]
        %s276 = scalar_lea.vmem [#allocation7], 16
        %v277 = vld [vmem:[%s276] sm:$0xff]
        %s278 = scalar_lea.vmem [#allocation7], 24
        %v279 = vld [vmem:[%s278] sm:$0xff]
        %s280 = scalar_lea.vmem [#allocation7], 32
        %v281 = vld [vmem:[%s280] sm:$0xff]
        %v282 = vld [vmem:[%s235] sm:$0xff]
        %v283 = vld [vmem:[%s235 + $0x8] sm:$0xff]
        %vm284 = vcmask 64512
        %v286 = vsel %vm284, %v273, 0
        %288 = vmatprep.subr.mxu0 0.0
        %289 = vmatpush1.msra.mxu0 0.0
        %290 = vmatprep.subr.mxu0 0.0
        %291 = vmatpush1.msra.mxu0 0.0
        %292 = vmatprep.subr.mxu0 0.0
        %293 = vmatpush1.msra.mxu0 0.0
        %294 = vmatprep.subr.mxu0 0.0
        %295 = vmatpush1.msra.mxu0 0.0
        %296 = vmatprep.subr.mxu0 0.0
        %297 = vmatpush1.msra.mxu0 0.0
        %298 = vmatprep.subr.mxu0 0.0
        %299 = vmatpush1.msra.mxu0 0.0
        %300 = vmatprep.subr.mxu0 0.0
        %301 = vmatpush1.msra.mxu0 0.0
        %302 = vmatprep.subr.mxu0 0.0
        %303 = vmatpush1.msra.mxu0 0.0
        %304 = vmatprep.subr.mxu0 0.0
        %305 = vmatpush1.msra.mxu0 0.0
        %306 = vmatprep.subr.mxu0 0.0
        %307 = vmatpush1.msra.mxu0 0.0
        %308 = vmatprep.subr.mxu0 0.0
        %309 = vmatpush1.msra.mxu0 0.0
        %310 = vmatprep.subr.mxu0 0.0
        %311 = vmatpush1.msra.mxu0 0.0
        %312 = vmatprep.subr.mxu0 0.0
        %313 = vmatpush1.msra.mxu0 0.0
        %314 = vmatprep.subr.mxu0 0.0
        %315 = vmatpush1.msra.mxu0 0.0
        %316 = vmatprep.subr.mxu0 0.0
        %317 = vmatpush1.msra.mxu0 0.0
        %318 = vmatprep.subr.mxu0 %v283
        %319 = vmatpush1.msra.mxu0 %v282
        %320 = vmatprep.subr.mxu0 0.0
        %321 = vmatpush2.msra.mxu0 0.0
        %322 = vmatprep.subr.mxu0 0.0
        %323 = vmatpush2.msra.mxu0 0.0
        %324 = vmatprep.subr.mxu0 0.0
        %325 = vmatpush2.msra.mxu0 0.0
        %326 = vmatprep.subr.mxu0 0.0
        %327 = vmatpush2.msra.mxu0 0.0
        %328 = vmatprep.subr.mxu0 0.0
        %329 = vmatpush2.msra.mxu0 0.0
        %330 = vmatprep.subr.mxu0 0.0
        %331 = vmatpush2.msra.mxu0 0.0
        %332 = vmatprep.subr.mxu0 0.0
        %333 = vmatpush2.msra.mxu0 0.0
        %334 = vmatprep.subr.mxu0 0.0
        %335 = vmatpush2.msra.mxu0 0.0
        %336 = vmatprep.subr.mxu0 0.0
        %337 = vmatpush2.msra.mxu0 0.0
        %338 = vmatprep.subr.mxu0 0.0
        %339 = vmatpush2.msra.mxu0 0.0
        %340 = vmatprep.subr.mxu0 0.0
        %341 = vmatpush2.msra.mxu0 0.0
        %342 = vmatprep.subr.mxu0 0.0
        %343 = vmatpush2.msra.mxu0 0.0
        %344 = vmatprep.subr.mxu0 0.0
        %345 = vmatpush2.msra.mxu0 0.0
        %346 = vmatprep.subr.mxu0 0.0
        %347 = vmatpush2.msra.mxu0 0.0
        %348 = vmatprep.subr.mxu0 0.0
        %349 = vmatpush2.msra.mxu0 0.0
        %350 = vmatprep.subr.mxu0 0.0
        %351 = vmatpush2.msra.mxu0 0.0
        %352 = vmatprep.mubr.f32.mxu0 0.0
        %353 = vmatmul.mubr.f32.gmra.mxu0 %v286
        %v354 = vpop.f32.mrf.mxu0
        %v355 = vadd.f32 0.0, %v354
        %v356 = vpop.f32.mrf.mxu0
        %357 = vdwg.mxu0
        %v359 = vsel %vm284, %v275, 0
        %361 = vmatprep.subr.mxu0 0.0
        %362 = vmatpush1.msra.mxu0 0.0
        %363 = vmatprep.subr.mxu0 0.0
        %364 = vmatpush1.msra.mxu0 0.0
        %365 = vmatprep.subr.mxu0 0.0
        %366 = vmatpush1.msra.mxu0 0.0
        %367 = vmatprep.subr.mxu0 0.0
        %368 = vmatpush1.msra.mxu0 0.0
        %369 = vmatprep.subr.mxu0 0.0
        %370 = vmatpush1.msra.mxu0 0.0
        %371 = vmatprep.subr.mxu0 0.0
        %372 = vmatpush1.msra.mxu0 0.0
        %373 = vmatprep.subr.mxu0 0.0
        %374 = vmatpush1.msra.mxu0 0.0
        %375 = vmatprep.subr.mxu0 0.0
        %376 = vmatpush1.msra.mxu0 0.0
        %377 = vmatprep.subr.mxu0 0.0
        %378 = vmatpush1.msra.mxu0 0.0
        %379 = vmatprep.subr.mxu0 0.0
        %380 = vmatpush1.msra.mxu0 0.0
        %381 = vmatprep.subr.mxu0 0.0
        %382 = vmatpush1.msra.mxu0 0.0
        %383 = vmatprep.subr.mxu0 0.0
        %384 = vmatpush1.msra.mxu0 0.0
        %385 = vmatprep.subr.mxu0 0.0
        %386 = vmatpush1.msra.mxu0 0.0
        %387 = vmatprep.subr.mxu0 0.0
        %388 = vmatpush1.msra.mxu0 0.0
        %389 = vmatprep.subr.mxu0 0.0
        %390 = vmatpush1.msra.mxu0 0.0
        %391 = vmatprep.subr.mxu0 %v283
        %392 = vmatpush1.msra.mxu0 %v282
        %393 = vmatprep.subr.mxu0 0.0
        %394 = vmatpush2.msra.mxu0 0.0
        %395 = vmatprep.subr.mxu0 0.0
        %396 = vmatpush2.msra.mxu0 0.0
        %397 = vmatprep.subr.mxu0 0.0
        %398 = vmatpush2.msra.mxu0 0.0
        %399 = vmatprep.subr.mxu0 0.0
        %400 = vmatpush2.msra.mxu0 0.0
        %401 = vmatprep.subr.mxu0 0.0
        %402 = vmatpush2.msra.mxu0 0.0
        %403 = vmatprep.subr.mxu0 0.0
        %404 = vmatpush2.msra.mxu0 0.0
        %405 = vmatprep.subr.mxu0 0.0
        %406 = vmatpush2.msra.mxu0 0.0
        %407 = vmatprep.subr.mxu0 0.0
        %408 = vmatpush2.msra.mxu0 0.0
        %409 = vmatprep.subr.mxu0 0.0
        %410 = vmatpush2.msra.mxu0 0.0
        %411 = vmatprep.subr.mxu0 0.0
        %412 = vmatpush2.msra.mxu0 0.0
        %413 = vmatprep.subr.mxu0 0.0
        %414 = vmatpush2.msra.mxu0 0.0
        %415 = vmatprep.subr.mxu0 0.0
        %416 = vmatpush2.msra.mxu0 0.0
        %417 = vmatprep.subr.mxu0 0.0
        %418 = vmatpush2.msra.mxu0 0.0
        %419 = vmatprep.subr.mxu0 0.0
        %420 = vmatpush2.msra.mxu0 0.0
        %421 = vmatprep.subr.mxu0 0.0
        %422 = vmatpush2.msra.mxu0 0.0
        %423 = vmatprep.subr.mxu0 0.0
        %424 = vmatpush2.msra.mxu0 0.0
        %425 = vmatprep.mubr.f32.mxu0 0.0
        %426 = vmatmul.mubr.f32.gmra.mxu0 %v359
        %v427 = vpop.f32.mrf.mxu0
        %v428 = vadd.f32 0.0, %v427
        %v429 = vpop.f32.mrf.mxu0
        %v430 = vadd.f32 0.0, %v429
        %431 = vdwg.mxu0
        %434 = vrot.lane.b32.xlu0 %v428, 127
        %v435 = vpop.permute.xlu0 %434
        %436 = vrot.lane.b32.xlu0 %v430, 127
        %v437 = vpop.permute.xlu0 %436
        %vm438 = vcmask 1039360
        %v439 = vsel %vm438, %v435, %v437
        %v441 = vadd.f32 %v355, %v439
        %v443 = vsel %vm284, %v277, 0
        %445 = vmatprep.subr.mxu0 0.0
        %446 = vmatpush1.msra.mxu0 0.0
        %447 = vmatprep.subr.mxu0 0.0
        %448 = vmatpush1.msra.mxu0 0.0
        %449 = vmatprep.subr.mxu0 0.0
        %450 = vmatpush1.msra.mxu0 0.0
        %451 = vmatprep.subr.mxu0 0.0
        %452 = vmatpush1.msra.mxu0 0.0
        %453 = vmatprep.subr.mxu0 0.0
        %454 = vmatpush1.msra.mxu0 0.0
        %455 = vmatprep.subr.mxu0 0.0
        %456 = vmatpush1.msra.mxu0 0.0
        %457 = vmatprep.subr.mxu0 0.0
        %458 = vmatpush1.msra.mxu0 0.0
        %459 = vmatprep.subr.mxu0 0.0
        %460 = vmatpush1.msra.mxu0 0.0
        %461 = vmatprep.subr.mxu0 0.0
        %462 = vmatpush1.msra.mxu0 0.0
        %463 = vmatprep.subr.mxu0 0.0
        %464 = vmatpush1.msra.mxu0 0.0
        %465 = vmatprep.subr.mxu0 0.0
        %466 = vmatpush1.msra.mxu0 0.0
        %467 = vmatprep.subr.mxu0 0.0
        %468 = vmatpush1.msra.mxu0 0.0
        %469 = vmatprep.subr.mxu0 0.0
        %470 = vmatpush1.msra.mxu0 0.0
        %471 = vmatprep.subr.mxu0 0.0
        %472 = vmatpush1.msra.mxu0 0.0
        %473 = vmatprep.subr.mxu0 0.0
        %474 = vmatpush1.msra.mxu0 0.0
        %475 = vmatprep.subr.mxu0 %v283
        %476 = vmatpush1.msra.mxu0 %v282
        %477 = vmatprep.subr.mxu0 0.0
        %478 = vmatpush2.msra.mxu0 0.0
        %479 = vmatprep.subr.mxu0 0.0
        %480 = vmatpush2.msra.mxu0 0.0
        %481 = vmatprep.subr.mxu0 0.0
        %482 = vmatpush2.msra.mxu0 0.0
        %483 = vmatprep.subr.mxu0 0.0
        %484 = vmatpush2.msra.mxu0 0.0
        %485 = vmatprep.subr.mxu0 0.0
        %486 = vmatpush2.msra.mxu0 0.0
        %487 = vmatprep.subr.mxu0 0.0
        %488 = vmatpush2.msra.mxu0 0.0
        %489 = vmatprep.subr.mxu0 0.0
        %490 = vmatpush2.msra.mxu0 0.0
        %491 = vmatprep.subr.mxu0 0.0
        %492 = vmatpush2.msra.mxu0 0.0
        %493 = vmatprep.subr.mxu0 0.0
        %494 = vmatpush2.msra.mxu0 0.0
        %495 = vmatprep.subr.mxu0 0.0
        %496 = vmatpush2.msra.mxu0 0.0
        %497 = vmatprep.subr.mxu0 0.0
        %498 = vmatpush2.msra.mxu0 0.0
        %499 = vmatprep.subr.mxu0 0.0
        %500 = vmatpush2.msra.mxu0 0.0
        %501 = vmatprep.subr.mxu0 0.0
        %502 = vmatpush2.msra.mxu0 0.0
        %503 = vmatprep.subr.mxu0 0.0
        %504 = vmatpush2.msra.mxu0 0.0
        %505 = vmatprep.subr.mxu0 0.0
        %506 = vmatpush2.msra.mxu0 0.0
        %507 = vmatprep.subr.mxu0 0.0
        %508 = vmatpush2.msra.mxu0 0.0
        %509 = vmatprep.mubr.f32.mxu0 0.0
        %510 = vmatmul.mubr.f32.gmra.mxu0 %v443
        %v511 = vpop.f32.mrf.mxu0
        %v512 = vadd.f32 0.0, %v511
        %v513 = vpop.f32.mrf.mxu0
        %v514 = vadd.f32 0.0, %v513
        %515 = vdwg.mxu0
        %518 = vrot.lane.b32.xlu0 %v512, 126
        %v519 = vpop.permute.xlu0 %518
        %520 = vrot.lane.b32.xlu0 %v514, 126
        %v521 = vpop.permute.xlu0 %520
        %vm522 = vcmask 1031168
        %v523 = vsel %vm522, %v519, %v521
        %v525 = vadd.f32 %v441, %v523
        %v527 = vsel %vm284, %v279, 0
        %529 = vmatprep.subr.mxu0 0.0
        %530 = vmatpush1.msra.mxu0 0.0
        %531 = vmatprep.subr.mxu0 0.0
        %532 = vmatpush1.msra.mxu0 0.0
        %533 = vmatprep.subr.mxu0 0.0
        %534 = vmatpush1.msra.mxu0 0.0
        %535 = vmatprep.subr.mxu0 0.0
        %536 = vmatpush1.msra.mxu0 0.0
        %537 = vmatprep.subr.mxu0 0.0
        %538 = vmatpush1.msra.mxu0 0.0
        %539 = vmatprep.subr.mxu0 0.0
        %540 = vmatpush1.msra.mxu0 0.0
        %541 = vmatprep.subr.mxu0 0.0
        %542 = vmatpush1.msra.mxu0 0.0
        %543 = vmatprep.subr.mxu0 0.0
        %544 = vmatpush1.msra.mxu0 0.0
        %545 = vmatprep.subr.mxu0 0.0
        %546 = vmatpush1.msra.mxu0 0.0
        %547 = vmatprep.subr.mxu0 0.0
        %548 = vmatpush1.msra.mxu0 0.0
        %549 = vmatprep.subr.mxu0 0.0
        %550 = vmatpush1.msra.mxu0 0.0
        %551 = vmatprep.subr.mxu0 0.0
        %552 = vmatpush1.msra.mxu0 0.0
        %553 = vmatprep.subr.mxu0 0.0
        %554 = vmatpush1.msra.mxu0 0.0
        %555 = vmatprep.subr.mxu0 0.0
        %556 = vmatpush1.msra.mxu0 0.0
        %557 = vmatprep.subr.mxu0 0.0
        %558 = vmatpush1.msra.mxu0 0.0
        %559 = vmatprep.subr.mxu0 %v283
        %560 = vmatpush1.msra.mxu0 %v282
        %561 = vmatprep.subr.mxu0 0.0
        %562 = vmatpush2.msra.mxu0 0.0
        %563 = vmatprep.subr.mxu0 0.0
        %564 = vmatpush2.msra.mxu0 0.0
        %565 = vmatprep.subr.mxu0 0.0
        %566 = vmatpush2.msra.mxu0 0.0
        %567 = vmatprep.subr.mxu0 0.0
        %568 = vmatpush2.msra.mxu0 0.0
        %569 = vmatprep.subr.mxu0 0.0
        %570 = vmatpush2.msra.mxu0 0.0
        %571 = vmatprep.subr.mxu0 0.0
        %572 = vmatpush2.msra.mxu0 0.0
        %573 = vmatprep.subr.mxu0 0.0
        %574 = vmatpush2.msra.mxu0 0.0
        %575 = vmatprep.subr.mxu0 0.0
        %576 = vmatpush2.msra.mxu0 0.0
        %577 = vmatprep.subr.mxu0 0.0
        %578 = vmatpush2.msra.mxu0 0.0
        %579 = vmatprep.subr.mxu0 0.0
        %580 = vmatpush2.msra.mxu0 0.0
        %581 = vmatprep.subr.mxu0 0.0
        %582 = vmatpush2.msra.mxu0 0.0
        %583 = vmatprep.subr.mxu0 0.0
        %584 = vmatpush2.msra.mxu0 0.0
        %585 = vmatprep.subr.mxu0 0.0
        %586 = vmatpush2.msra.mxu0 0.0
        %587 = vmatprep.subr.mxu0 0.0
        %588 = vmatpush2.msra.mxu0 0.0
        %589 = vmatprep.subr.mxu0 0.0
        %590 = vmatpush2.msra.mxu0 0.0
        %591 = vmatprep.subr.mxu0 0.0
        %592 = vmatpush2.msra.mxu0 0.0
        %593 = vmatprep.mubr.f32.mxu0 0.0
        %594 = vmatmul.mubr.f32.gmra.mxu0 %v527
        %v595 = vpop.f32.mrf.mxu0
        %v596 = vadd.f32 0.0, %v595
        %v597 = vpop.f32.mrf.mxu0
        %v598 = vadd.f32 0.0, %v597
        %599 = vdwg.mxu0
        %602 = vrot.lane.b32.xlu0 %v596, 125
        %v603 = vpop.permute.xlu0 %602
        %604 = vrot.lane.b32.xlu0 %v598, 125
        %v605 = vpop.permute.xlu0 %604
        %vm606 = vcmask 1022976
        %v607 = vsel %vm606, %v603, %v605
        %v609 = vadd.f32 %v525, %v607
        %v611 = vsel %vm284, %v281, 0
        %613 = vmatprep.subr.mxu0 0.0
        %614 = vmatpush1.msra.mxu0 0.0
        %615 = vmatprep.subr.mxu0 0.0
        %616 = vmatpush1.msra.mxu0 0.0
        %617 = vmatprep.subr.mxu0 0.0
        %618 = vmatpush1.msra.mxu0 0.0
        %619 = vmatprep.subr.mxu0 0.0
        %620 = vmatpush1.msra.mxu0 0.0
        %621 = vmatprep.subr.mxu0 0.0
        %622 = vmatpush1.msra.mxu0 0.0
        %623 = vmatprep.subr.mxu0 0.0
        %624 = vmatpush1.msra.mxu0 0.0
        %625 = vmatprep.subr.mxu0 0.0
        %626 = vmatpush1.msra.mxu0 0.0
        %627 = vmatprep.subr.mxu0 0.0
        %628 = vmatpush1.msra.mxu0 0.0
        %629 = vmatprep.subr.mxu0 0.0
        %630 = vmatpush1.msra.mxu0 0.0
        %631 = vmatprep.subr.mxu0 0.0
        %632 = vmatpush1.msra.mxu0 0.0
        %633 = vmatprep.subr.mxu0 0.0
        %634 = vmatpush1.msra.mxu0 0.0
        %635 = vmatprep.subr.mxu0 0.0
        %636 = vmatpush1.msra.mxu0 0.0
        %637 = vmatprep.subr.mxu0 0.0
        %638 = vmatpush1.msra.mxu0 0.0
        %639 = vmatprep.subr.mxu0 0.0
        %640 = vmatpush1.msra.mxu0 0.0
        %641 = vmatprep.subr.mxu0 0.0
        %642 = vmatpush1.msra.mxu0 0.0
        %643 = vmatprep.subr.mxu0 %v283
        %644 = vmatpush1.msra.mxu0 %v282
        %645 = vmatprep.subr.mxu0 0.0
        %646 = vmatpush2.msra.mxu0 0.0
        %647 = vmatprep.subr.mxu0 0.0
        %648 = vmatpush2.msra.mxu0 0.0
        %649 = vmatprep.subr.mxu0 0.0
        %650 = vmatpush2.msra.mxu0 0.0
        %651 = vmatprep.subr.mxu0 0.0
        %652 = vmatpush2.msra.mxu0 0.0
        %653 = vmatprep.subr.mxu0 0.0
        %654 = vmatpush2.msra.mxu0 0.0
        %655 = vmatprep.subr.mxu0 0.0
        %656 = vmatpush2.msra.mxu0 0.0
        %657 = vmatprep.subr.mxu0 0.0
        %658 = vmatpush2.msra.mxu0 0.0
        %659 = vmatprep.subr.mxu0 0.0
        %660 = vmatpush2.msra.mxu0 0.0
        %661 = vmatprep.subr.mxu0 0.0
        %662 = vmatpush2.msra.mxu0 0.0
        %663 = vmatprep.subr.mxu0 0.0
        %664 = vmatpush2.msra.mxu0 0.0
        %665 = vmatprep.subr.mxu0 0.0
        %666 = vmatpush2.msra.mxu0 0.0
        %667 = vmatprep.subr.mxu0 0.0
        %668 = vmatpush2.msra.mxu0 0.0
        %669 = vmatprep.subr.mxu0 0.0
        %670 = vmatpush2.msra.mxu0 0.0
        %671 = vmatprep.subr.mxu0 0.0
        %672 = vmatpush2.msra.mxu0 0.0
        %673 = vmatprep.subr.mxu0 0.0
        %674 = vmatpush2.msra.mxu0 0.0
        %675 = vmatprep.subr.mxu0 0.0
        %676 = vmatpush2.msra.mxu0 0.0
        %677 = vmatprep.mubr.f32.mxu0 0.0
        %678 = vmatmul.mubr.f32.gmra.mxu0 %v611
        %v679 = vpop.f32.mrf.mxu0
        %v680 = vadd.f32 0.0, %v679
        %v681 = vpop.f32.mrf.mxu0
        %v682 = vadd.f32 0.0, %v681
        %683 = vdwg.mxu0
        %686 = vrot.lane.b32.xlu0 %v680, 124
        %v687 = vpop.permute.xlu0 %686
        %688 = vrot.lane.b32.xlu0 %v682, 124
        %v689 = vpop.permute.xlu0 %688
        %vm690 = vcmask 1014784
        %v691 = vsel %vm690, %v687, %v689
        %v693 = vadd.f32 %v609, %v691
        %s694 = sld [smem:[#allocation3 + %s31]]
        %696 = vset.pattern.permute.xlu0 0
        %697 = vperm.xlu0 %696, %v272
        %v698 = vpop.permute.xlu0 %697
        %v700 = vadd.f32 %v693, %v698
        %v701 = vstv %s694
        %v702 = vmul.f32 %v700, %v701
        %703 = vst [vmem:[%s263] sm:$0xff] %v702
        %v704 = vld [vmem:[%s235] sm:$0xff]
        %v705 = vld [vmem:[%s235 + $0x8] sm:$0xff]
        %vm706 = vcmask 31744
        %v707 = vsel %vm706, %v705, 0.0
        %v708 = vadd.f32 %v704, %v707
        %709 = vadd.xlane.f32.xlu0 %v708
        %v710 = vpop.xlane.xlu0 %709
        %v711 = vld [vmem:[%s4] sm:$0xff]
        %v713 = vlaneseq
        %v714 = vand.u32 %v713, 127
        %v715 = vlaneseq
        %v716 = vshrl.u32 %v715, 7
        %v717 = vsub.s32 %v714, %v716
        %v718 = vrot.slane %v710, %v717
        %v719 = vsel %vm284, %v718, 0
        %721 = vmatprep.subr.mxu0 0.0
        %722 = vmatpush1.msra.mxu0 0.0
        %723 = vmatprep.subr.mxu0 0.0
        %724 = vmatpush1.msra.mxu0 0.0
        %725 = vmatprep.subr.mxu0 0.0
        %726 = vmatpush1.msra.mxu0 0.0
        %727 = vmatprep.subr.mxu0 0.0
        %728 = vmatpush1.msra.mxu0 0.0
        %729 = vmatprep.subr.mxu0 0.0
        %730 = vmatpush1.msra.mxu0 0.0
        %731 = vmatprep.subr.mxu0 0.0
        %732 = vmatpush1.msra.mxu0 0.0
        %733 = vmatprep.subr.mxu0 0.0
        %734 = vmatpush1.msra.mxu0 0.0
        %735 = vmatprep.subr.mxu0 0.0
        %736 = vmatpush1.msra.mxu0 0.0
        %737 = vmatprep.subr.mxu0 0.0
        %738 = vmatpush1.msra.mxu0 0.0
        %739 = vmatprep.subr.mxu0 0.0
        %740 = vmatpush1.msra.mxu0 0.0
        %741 = vmatprep.subr.mxu0 0.0
        %742 = vmatpush1.msra.mxu0 0.0
        %743 = vmatprep.subr.mxu0 0.0
        %744 = vmatpush1.msra.mxu0 0.0
        %745 = vmatprep.subr.mxu0 0.0
        %746 = vmatpush1.msra.mxu0 0.0
        %747 = vmatprep.subr.mxu0 0.0
        %748 = vmatpush1.msra.mxu0 0.0
        %749 = vmatprep.subr.mxu0 0.0
        %750 = vmatpush1.msra.mxu0 0.0
        %751 = vmatprep.subr.mxu0 0.0
        %752 = vmatpush1.msra.mxu0 %v711
        %753 = vmatprep.subr.mxu0 0.0
        %754 = vmatpush2.msra.mxu0 0.0
        %755 = vmatprep.subr.mxu0 0.0
        %756 = vmatpush2.msra.mxu0 0.0
        %757 = vmatprep.subr.mxu0 0.0
        %758 = vmatpush2.msra.mxu0 0.0
        %759 = vmatprep.subr.mxu0 0.0
        %760 = vmatpush2.msra.mxu0 0.0
        %761 = vmatprep.subr.mxu0 0.0
        %762 = vmatpush2.msra.mxu0 0.0
        %763 = vmatprep.subr.mxu0 0.0
        %764 = vmatpush2.msra.mxu0 0.0
        %765 = vmatprep.subr.mxu0 0.0
        %766 = vmatpush2.msra.mxu0 0.0
        %767 = vmatprep.subr.mxu0 0.0
        %768 = vmatpush2.msra.mxu0 0.0
        %769 = vmatprep.subr.mxu0 0.0
        %770 = vmatpush2.msra.mxu0 0.0
        %771 = vmatprep.subr.mxu0 0.0
        %772 = vmatpush2.msra.mxu0 0.0
        %773 = vmatprep.subr.mxu0 0.0
        %774 = vmatpush2.msra.mxu0 0.0
        %775 = vmatprep.subr.mxu0 0.0
        %776 = vmatpush2.msra.mxu0 0.0
        %777 = vmatprep.subr.mxu0 0.0
        %778 = vmatpush2.msra.mxu0 0.0
        %779 = vmatprep.subr.mxu0 0.0
        %780 = vmatpush2.msra.mxu0 0.0
        %781 = vmatprep.subr.mxu0 0.0
        %782 = vmatpush2.msra.mxu0 0.0
        %783 = vmatprep.subr.mxu0 0.0
        %784 = vmatpush2.msra.mxu0 0.0
        %785 = vmatprep.mubr.f32.mxu0 0.0
        %786 = vmatmul.mubr.f32.gmra.mxu0 %v719
        %v787 = vpop.f32.mrf.mxu0
        %v788 = vadd.f32 0.0, %v787
        %v789 = vpop.f32.mrf.mxu0
        %790 = vdwg.mxu0
        %v791 = vmul.f32 %v788, 0.0625
        %vm792 = vcmask 0
        %793 = vst.msk [vmem:[%s271] sm:$0x1] %vm792, %v791
        %s794 = sand.u32 %s128, 1
        %s795 = scalar_lea.sflag [#allocation6], %s794
        %s796 = sand.u32 %s128, 1
        %s797 = smul.addr %s796, 8
        %s798 = scalar_lea.vmem [#allocation9], %s797
        %p799 = scmp.lt.s32.totalorder %s31, 1
        %s800 = scalar_select %p799, %s31, 1
        %s801 = scalar_lea.vmem %s6, %s800
        // Predicated region
        $region45: #{tpu_custom_call.1} parent=35 // pred_check
          %p802 = pneg %p138
        $region46: #{tpu_custom_call.1} parent=35 // pred_check_branch
          %804 = sbr.rel (%p802) target = $region48
        $region47: #{tpu_custom_call.1} parent=35 // pred_region
          %s806 = ssub.s32 128, 128
          %807 = vsyncadd %s795, %s806
          %s808 = smul.addr %s31, 128
          %s809 = scalar_lea.hbm %s5, %s808
          %s811 = sshll.u32 %s798, 4
          %s812 = int_to_ptr.vmem [resolvable:$true] %s811
          %814 = dma.vmem_to_hbm [thread:$0]  %s812, 128, %s809, %s795
        $region48: #{tpu_custom_call.1} parent=35 // pred_fallthru
          _
        // Predicated region
        $region49: #{tpu_custom_call.1} parent=35 // pred_check
          %p815 = pneg %p164
        $region50: #{tpu_custom_call.1} parent=35 // pred_check_branch
          %817 = sbr.rel (%p815) target = $region52
        $region51: #{tpu_custom_call.1} parent=35 // pred_region
          _
        $region52: #{tpu_custom_call.1} parent=35 // pred_fallthru
          _
      $region36: #{tpu_custom_call.1} parent=5 // pred_fallthru
        _
      %p818 = scmp.le.s32.totalorder 2, %s26
      // Predicated region
      $region53: #{tpu_custom_call.1} parent=5 // pred_check
        %p819 = pneg %p818
      $region54: #{tpu_custom_call.1} parent=5 // pred_check_branch
        %821 = sbr.rel (%p819) target = $region56
      $region55: #{tpu_custom_call.1} parent=5 // pred_region
        %s822 = ssub.s32 %s26, 2
        // Predicated region
        $region57: #{tpu_custom_call.1} parent=55 // pred_check
          %p823 = pneg %p144
        $region58: #{tpu_custom_call.1} parent=55 // pred_check_branch
          %825 = sbr.rel (%p823) target = $region60
        $region59: #{tpu_custom_call.1} parent=55 // pred_region
          %s826 = sand.u32 %s129, 1
          %s827 = scalar_lea.sflag [#allocation6], %s826
          %s828 = sand.u32 %s129, 1
          %s829 = smul.addr %s828, 8
          %s830 = scalar_lea.vmem [#allocation9], %s829
          %831 = dma.done %s827, 128
        $region60: #{tpu_custom_call.1} parent=55 // pred_fallthru
          _
        // Predicated region
        $region61: #{tpu_custom_call.1} parent=55 // pred_check
          %p832 = pneg %p170
        $region62: #{tpu_custom_call.1} parent=55 // pred_check_branch
          %834 = sbr.rel (%p832) target = $region64
        $region63: #{tpu_custom_call.1} parent=55 // pred_region
          %p835 = scmp.lt.s32.totalorder %s32, 1
          %s836 = scalar_select %p835, %s32, 1
          %s837 = scalar_lea.vmem %s6, %s836
        $region64: #{tpu_custom_call.1} parent=55 // pred_fallthru
          _
      $region56: #{tpu_custom_call.1} parent=5 // pred_fallthru
        _
    $region6: #{tpu_custom_call.1} parent=1 // loop_footer
      %s30 = sadd.s32 1, %s26
    $region7: #{tpu_custom_call.1} parent=1 // loop_footer_branch
      %25 = sbr.rel target = $region3
    $region8: #{tpu_custom_call.1} parent=1 // loop_exit
      _
    %838 = vsyncpa [#allocation5], 1
    %s839 = scalar_lea.sflag [#allocation5], 1
    %840 = vsyncpa %s839, 1
    %841 = vsyncpa [#allocation8], 1
    %842 = vsyncpa [#allocation6], 1
    %s843 = scalar_lea.sflag [#allocation6], 1
    %844 = vsyncpa %s843, 1

</llo_original>
